<compile_context>
chip_gen: v7x
topology: tpu7x:2x2x1
jax: 0.10.0
libtpu: 0.0.40
codegen_flags: <defaults>
</compile_context>

<pallas_src>
import functools

import jax
import jax.numpy as jnp
from jax.experimental import pallas as pl
from jax.experimental.pallas import tpu as pltpu

BN_EPS = 1e-5
LANE = 128           # all hidden / output feature dims are zero-padded to this


def _round_up(n, m):
    return ((n + m - 1) // m) * m


# --------------------------------------------------------------------------- #
# Fused kernel: batch-tiled body + full-batch tail under pl.when(last tile).
#   body : relu(f0[BN0 folded]) -> relu(f1) -> relu(f1b) -> relu(f2)
#   tail : BN3 -> relu(f3) -> BN5 -> f5 -> softmax / sigmoid
# --------------------------------------------------------------------------- #
def _dnn_fused_kernel(x_ref,                 # (tile_b, n_in_pad) f32, batch tile
                      f0_w_ref,              # (n_in_pad, 128)   mxu_dtype (BN0 folded)
                      body_w_ref,            # (3, 128, 128)     mxu_dtype: f1, f1b, f2
                      body_b_ref,            # (4, 128)          f32: f0_b, f1_b, f1b_b, f2_b
                      tail_w_ref,            # (2, 128, 128)     mxu_dtype: f3, f5
                      tail_p_ref,            # (6, 128)          f32: b3_g,b3_b,b5_g,b5_b,f3_b,f5_b
                      out_ref,               # (B_pad, 128)      f32, full-batch resident
                      h2_ref,                # (B_pad, 128)      f32 scratch, persists across tiles
                      *, tile_b, batch, b_pad, inv_b, n_targets, use_softmax):
    i = pl.program_id(0)
    bb = body_b_ref[...]                      # (4, 128) f32

    def lin_relu(h, w, b):
        # MXU operands in the weights' dtype (bf16 default / f32); f32
        # accumulation, f32 bias-add + ReLU (VPU math stays f32 -> v5e friendly).
        y = jnp.dot(h.astype(w.dtype), w, preferred_element_type=jnp.float32) + b
        return jnp.maximum(y, 0.0)

    # ---- body on this batch tile (weights resident via constant index_maps)
    h = x_ref[...]                            # (tile_b, n_in_pad) f32
    h = lin_relu(h, f0_w_ref[...], bb[0:1])   # BN0-folded f0 : n_in_pad -> 128 (50 real)
    h = lin_relu(h, body_w_ref[0], bb[1:2])   # f1  : 128 -> 128 (40 real)
    h = lin_relu(h, body_w_ref[1], bb[2:3])   # f1b : 128 -> 128 (40 real)
    h = lin_relu(h, body_w_ref[2], bb[3:4])   # f2  : 128 -> 128 (10 real)

    start = pl.multiple_of(i * tile_b, 8)     # tile_b is a multiple of 8
    h2_ref[pl.ds(start, tile_b), :] = h       # stage h2 in persistent VMEM scratch

    # ---- full-batch tail (BN3 / BN5 need FULL-batch statistics)
    @pl.when(i == pl.num_programs(0) - 1)
    def _tail():
        h2 = h2_ref[...]                      # (b_pad, 128) f32
        mask_rows = (b_pad != batch)          # padded batch rows must not pollute BN stats
        if mask_rows:
            rowmask = jax.lax.broadcasted_iota(jnp.int32, (b_pad, LANE), 0) < batch

        def bn(h, g, b):
            # training-mode BatchNorm1d, fused single pass (biased variance),
            # masked to the real batch rows; padded LANES are exactly 0 -> stay 0.
            hm = jnp.where(rowmask, h, 0.0) if mask_rows else h
            s1 = jnp.sum(hm, axis=0, keepdims=True)
            s2 = jnp.sum(hm * hm, axis=0, keepdims=True)
            mu = s1 * inv_b
            var = jnp.maximum(s2 * inv_b - mu * mu, 0.0)
            return g * ((h - mu) * jax.lax.rsqrt(var + BN_EPS)) + b

        tp = tail_p_ref[...]                  # (6, 128) f32
        w_dt = tail_w_ref.dtype

        h = bn(h2, tp[0:1], tp[1:2])                                        # b3
        h = jnp.maximum(
            jnp.dot(h.astype(w_dt), tail_w_ref[0],
                    preferred_element_type=jnp.float32) + tp[4:5], 0.0)     # relu(f3)
        h = bn(h, tp[2:3], tp[3:4])                                         # b5
        logits = jnp.dot(h.astype(w_dt), tail_w_ref[1],
                         preferred_element_type=jnp.float32) + tp[5:6]      # f5

        lane = jax.lax.broadcasted_iota(jnp.int32, logits.shape, 1)
        valid = lane < n_targets
        if use_softmax:
            masked = jnp.where(valid, logits, jnp.full_like(logits, -1e30))
            m = jnp.max(masked, axis=1, keepdims=True)
            e = jnp.where(valid, jnp.exp(masked - m), 0.0)
            inv = pl.reciprocal(jnp.sum(e, axis=1, keepdims=True))   # exact recip-then-mul
            out_ref[...] = e * inv
        else:
            out_ref[...] = jnp.where(valid, 1.0 / (1.0 + jnp.exp(-logits)), 0.0)


# --------------------------------------------------------------------------- #
# Weight preparation: fold BN0 into f0, zero-pad to 128 lanes, pack operands.
# --------------------------------------------------------------------------- #
def _prepare_operands(xf, params, mxu_dtype, n_in_pad):
    P = LANE
    B, n_in = xf.shape

    # BN0: full-batch per-feature stats of the flattened input, single fused
    # pass (sum + sum of squares) so xf is streamed from HBM once here.
    s1 = jnp.sum(xf, axis=0)
    s2 = jnp.sum(xf * xf, axis=0)
    mu0 = s1 / B
    var0 = jnp.maximum(s2 / B - mu0 * mu0, 0.0)                  # biased variance
    scale0 = params["b0_g"][0] * jax.lax.rsqrt(var0 + BN_EPS)
    shift0 = params["b0_b"][0] - mu0 * scale0
    # bn0(x) @ W + b  ==  x @ (scale * W) + (shift @ W + b)
    f0_w = params["f0_w"] * scale0[:, None]
    f0_b = params["f0_b"] + shift0[None, :] @ params["f0_w"]

    def pad_mat(w, rows, cols):
        out = jnp.zeros((rows, cols), jnp.float32)
        return out.at[: w.shape[0], : w.shape[1]].set(w.astype(jnp.float32))

    def pad_row(v, cols, fill=0.0):
        out = jnp.full((cols,), fill, jnp.float32)
        return out.at[: v.shape[1]].set(v[0].astype(jnp.float32))

    body_w = jnp.stack([pad_mat(params["f1_w"], P, P),
                        pad_mat(params["f1b_w"], P, P),
                        pad_mat(params["f2_w"], P, P)]).astype(mxu_dtype)
    body_b = jnp.stack([pad_row(f0_b, P),
                        pad_row(params["f1_b"], P),
                        pad_row(params["f1b_b"], P),
                        pad_row(params["f2_b"], P)])
    tail_w = jnp.stack([pad_mat(params["f3_w"], P, P),
                        pad_mat(params["f5_w"], P, P)]).astype(mxu_dtype)
    tail_p = jnp.stack([pad_row(params["b3_g"], P, fill=1.0),
                        pad_row(params["b3_b"], P),
                        pad_row(params["b5_g"], P, fill=1.0),
                        pad_row(params["b5_b"], P),
                        pad_row(params["f3_b"], P),
                        pad_row(params["f5_b"], P)])
    return {
        "f0_w": pad_mat(f0_w, n_in_pad, P).astype(mxu_dtype),
        "body_w": body_w, "body_b": body_b,
        "tail_w": tail_w, "tail_p": tail_p,
    }


# --------------------------------------------------------------------------- #
# Forward wrapper
# --------------------------------------------------------------------------- #
def dnn_forward(x, params, n_targets, *, tile_b=None, mxu_dtype=jnp.bfloat16):
    if n_targets > 2:
        use_softmax = True
    elif n_targets in (1, 2):
        use_softmax = False
    else:
        raise ValueError("I don't understand n_targets " + str(n_targets))

    B = x.shape[0]
    xf = x.reshape(B, -1).astype(jnp.float32)        # torch.flatten(x, start_dim=1)
    n_in = xf.shape[1]
    n_in_pad = _round_up(n_in, LANE)                 # lane-dense x block + f0 K dim

    packed = _prepare_operands(xf, params, mxu_dtype, n_in_pad)

    # Batch tile: large (the body is per-grid-step-overhead bound), sublane
    # aligned, and shrunk for very wide inputs so the double-buffered x tiles
    # stay under ~8 MiB.
    if tile_b is None:
        budget_rows = max(8, (((8 << 20) // (2 * n_in_pad * 4)) // 8) * 8)
        tile_b = min(4096, budget_rows, _round_up(B, 8))
    tile_b = max(8, (tile_b // 8) * 8)
    num_tiles = pl.cdiv(B, tile_b)
    B_pad = num_tiles * tile_b                       # whole number of tiles

    # Zero-pad batch rows and input features together (padded rows are masked
    # out of the BN3/BN5 statistics inside the kernel; padded feature columns
    # hit zero rows of f0_w).
    xf_pad = jnp.pad(xf, ((0, B_pad - B), (0, n_in_pad - n_in)))

    w_bytes = 2 if mxu_dtype == jnp.bfloat16 else 4
    vmem_needed = (2 * tile_b * n_in_pad * 4                       # double-buffered x tiles
                   + 2 * B_pad * LANE * 4                          # h2 scratch + resident output
                   + w_bytes * (n_in_pad * LANE + 5 * LANE * LANE) # resident weights
                   + 4 * 10 * LANE)                                # packed biases / BN params
    # 64 MiB is safe on every generation (v7x physical VMEM = 64 MiB).
    vmem_limit = int(min(64 << 20, max(24 << 20, 2 * vmem_needed)))
    # TODO(synk): for very large batches (h2 + out > ~24 MiB, i.e. B >~ 24k on
    # v7x) split the tail into a batch-tiled two-phase grid (BN-stats
    # accumulation phase, then normalize/f3/f5/softmax phase).

    flops = 2 * B_pad * (n_in_pad * LANE + 5 * LANE * LANE) + 40 * B_pad * LANE
    bytes_accessed = (4 * B_pad * (n_in_pad + LANE)
                      + w_bytes * (n_in_pad * LANE + 5 * LANE * LANE)
                      + 4 * 10 * LANE)

    kernel = functools.partial(
        _dnn_fused_kernel, tile_b=tile_b, batch=B, b_pad=B_pad,
        inv_b=1.0 / B, n_targets=n_targets, use_softmax=use_softmax)

    out_pad = pl.pallas_call(
        kernel,
        out_shape=jax.ShapeDtypeStruct((B_pad, LANE), jnp.float32),
        grid_spec=pltpu.PrefetchScalarGridSpec(
            num_scalar_prefetch=0,
            grid=(num_tiles,),
            in_specs=[
                pl.BlockSpec((tile_b, n_in_pad), lambda i: (i, 0)),     # x batch tile
                pl.BlockSpec((n_in_pad, LANE), lambda i: (0, 0)),       # f0 (BN0 folded)
                pl.BlockSpec((3, LANE, LANE), lambda i: (0, 0, 0)),     # f1, f1b, f2
                pl.BlockSpec((4, LANE), lambda i: (0, 0)),              # body biases
                pl.BlockSpec((2, LANE, LANE), lambda i: (0, 0, 0)),     # f3, f5
                pl.BlockSpec((6, LANE), lambda i: (0, 0)),              # BN3/BN5 + tail biases
            ],
            out_specs=pl.BlockSpec((B_pad, LANE), lambda i: (0, 0)),    # full-batch resident
            scratch_shapes=[pltpu.VMEM((B_pad, LANE), jnp.float32)],    # h2, persists across tiles
        ),
        compiler_params=pltpu.CompilerParams(
            # The batch axis carries the h2 scratch / full-batch tail, so it is
            # a sequential ("arbitrary") axis by construction.
            dimension_semantics=("arbitrary",),
            vmem_limit_bytes=vmem_limit),
        cost_estimate=pl.CostEstimate(
            flops=flops, transcendentals=B_pad * LANE,
            bytes_accessed=bytes_accessed),
    )(xf_pad, packed["f0_w"], packed["body_w"], packed["body_b"],
      packed["tail_w"], packed["tail_p"])

    # lane-dense padded output block -> slice real batch rows + real targets
    return out_pad[:B, :n_targets]


# --------------------------------------------------------------------------- #
# Parameters + pure-JAX reference (faithful f32 PyTorch-forward semantics)
# --------------------------------------------------------------------------- #
def init_params(key, n_inputs, n_targets):
    """Deterministic synthetic params, keyed by the module's layer names.
    Linear weights stored (in, out); BN gamma/beta randomized (instead of the
    torch 1/0 default) so their wiring is actually exercised."""
    lin_dims = {"f0": (n_inputs, 50), "f1": (50, 40), "f1b": (40, 40),
                "f2": (40, 10), "f3": (10, 5), "f5": (5, n_targets)}
    bn_dims = {"b0": n_inputs, "b3": 10, "b5": 5}
    params = {}
    keys = jax.random.split(key, 2 * (len(lin_dims) + len(bn_dims)))
    it = iter(keys)
    for name, (din, dout) in lin_dims.items():
        bound = 1.0 / (din ** 0.5)
        params[f"{name}_w"] = jax.random.uniform(
            next(it), (din, dout), jnp.float32, -bound, bound)
        params[f"{name}_b"] = jax.random.uniform(
            next(it), (1, dout), jnp.float32, -bound, bound)
    for name, d in bn_dims.items():
        params[f"{name}_g"] = jax.random.uniform(next(it), (1, d), jnp.float32, 0.5, 1.5)
        params[f"{name}_b"] = jax.random.uniform(next(it), (1, d), jnp.float32, -0.5, 0.5)
    return params


def dnn_reference(x, params, n_targets):
    B = x.shape[0]
    h = x.reshape(B, -1).astype(jnp.float32)

    def bn(h, g, b):
        mu = jnp.mean(h, axis=0, keepdims=True)
        var = jnp.mean((h - mu) ** 2, axis=0, keepdims=True)     # biased
        return g * (h - mu) / jnp.sqrt(var + BN_EPS) + b

    relu = lambda z: jnp.maximum(z, 0.0)
    h = bn(h, params["b0_g"], params["b0_b"])
    h = relu(h @ params["f0_w"] + params["f0_b"])
    h = relu(h @ params["f1_w"] + params["f1_b"])
    h = relu(h @ params["f1b_w"] + params["f1b_b"])
    h = relu(h @ params["f2_w"] + params["f2_b"])
    h = bn(h, params["b3_g"], params["b3_b"])
    h = relu(h @ params["f3_w"] + params["f3_b"])
    h = bn(h, params["b5_g"], params["b5_b"])
    logits = h @ params["f5_w"] + params["f5_b"]
    if n_targets > 2:
        return jax.nn.softmax(logits, axis=1)
    return jax.nn.sigmoid(logits)


if __name__ == "__main__":
    key = jax.random.PRNGKey(0)
    kx, kp, kx2 = jax.random.split(key, 3)

    # B=64 with tile_b=16 -> a 4-step batch grid, exercising multi-tile body
    # plus the fused full-batch BN3/BN5 tail.  n_targets=3 -> softmax branch.
    B, C, H, W = 64, 4, 4, 4
    n_inputs = C * H * W
    n_targets = 3

    x = jax.random.normal(kx, (B, C, H, W), jnp.float32)
    params = init_params(kp, n_inputs, n_targets)
    ref = dnn_reference(x, params, n_targets)

    # ---- f32-MXU path: tight check against the reference.
    fwd_f32 = jax.jit(functools.partial(
        dnn_forward, n_targets=n_targets, tile_b=16, mxu_dtype=jnp.float32))
    out = jax.block_until_ready(fwd_f32(x, params))
    assert out.shape == (B, n_targets)
    assert jnp.allclose(out, ref, atol=1e-3, rtol=1e-3), "f32 mismatch vs reference"
    assert jnp.allclose(jnp.sum(out, axis=1), 1.0, atol=1e-5), "softmax rows must sum to 1"

    # ---- ragged batch (not a multiple of tile_b or 8): exercises batch
    # padding + masked BN3/BN5 statistics.
    Br = 52
    xr = x[:Br]
    out_r = jax.block_until_ready(jax.jit(functools.partial(
        dnn_forward, n_targets=n_targets, tile_b=16, mxu_dtype=jnp.float32))(xr, params))
    ref_r = dnn_reference(xr, params, n_targets)
    assert out_r.shape == (Br, n_targets)
    assert jnp.allclose(out_r, ref_r, atol=1e-3, rtol=1e-3), "ragged-batch mismatch"

    # ---- default path: bf16 MXU operands (v5e/v6e/v7x fast path); BN/ReLU/
    # softmax math stays f32.  Loose tolerance budgets the bf16 quantization.
    fwd_bf16 = jax.jit(functools.partial(dnn_forward, n_targets=n_targets, tile_b=16))
    out_bf16 = jax.block_until_ready(fwd_bf16(x, params))
    assert out_bf16.shape == (B, n_targets)
    assert bool(jnp.all(jnp.isfinite(out_bf16)))
    assert jnp.allclose(jnp.sum(out_bf16, axis=1), 1.0, atol=1e-4)
    assert jnp.allclose(out_bf16, ref, atol=1e-1, rtol=1e-1), "bf16 drift too large"

    # ---- sigmoid branch (n_targets=2), default tile selection.
    params2 = init_params(jax.random.fold_in(kp, 1), n_inputs, 2)
    x2 = jax.random.normal(kx2, (32, C, H, W), jnp.float32)
    out2 = jax.block_until_ready(jax.jit(functools.partial(
        dnn_forward, n_targets=2, mxu_dtype=jnp.float32))(x2, params2))
    ref2 = dnn_reference(x2, params2, 2)
    assert out2.shape == (32, 2)
    assert jnp.allclose(out2, ref2, atol=1e-3, rtol=1e-3), "sigmoid-branch mismatch"

    print("KERNEL_OK")
</pallas_src>

<mosaic_0001>
module attributes {stable_mosaic.version = 11 : i64} {
  func.func @_dnn_fused_kernel(%arg0: i32, %arg1: memref<16x128xf32, #tpu.memory_space<vmem>>, %arg2: memref<128x128xf32, #tpu.memory_space<vmem>>, %arg3: memref<3x128x128xf32, #tpu.memory_space<vmem>>, %arg4: memref<4x128xf32, #tpu.memory_space<vmem>>, %arg5: memref<2x128x128xf32, #tpu.memory_space<vmem>>, %arg6: memref<6x128xf32, #tpu.memory_space<vmem>>, %arg7: memref<64x128xf32, #tpu.memory_space<vmem>>, %arg8: memref<64x128xf32, #tpu.memory_space<vmem>>) attributes {dimension_semantics = [#tpu.dimension_semantics<arbitrary>], iteration_bounds = array<i64: 4>, scalar_prefetch = 0 : i64, scratch_operands = 1 : i64, tpu.core_type = #tpu.core_type<tc>, window_params = [{transform_indices = @transform_0, window_bounds = array<i64: 16, 128>}, {pipeline_mode = #tpu.pipeline_mode<synchronous>, transform_indices = @transform_1, window_bounds = array<i64: 128, 128>}, {pipeline_mode = #tpu.pipeline_mode<synchronous>, transform_indices = @transform_2, window_bounds = array<i64: 3, 128, 128>}, {pipeline_mode = #tpu.pipeline_mode<synchronous>, transform_indices = @transform_3, window_bounds = array<i64: 4, 128>}, {pipeline_mode = #tpu.pipeline_mode<synchronous>, transform_indices = @transform_4, window_bounds = array<i64: 2, 128, 128>}, {pipeline_mode = #tpu.pipeline_mode<synchronous>, transform_indices = @transform_5, window_bounds = array<i64: 6, 128>}, {pipeline_mode = #tpu.pipeline_mode<synchronous>, transform_indices = @transform_6, window_bounds = array<i64: 64, 128>}]} {
    %c0 = arith.constant 0 : index
    %c0_0 = arith.constant 0 : index
    %0 = vector.load %arg4[%c0, %c0_0] : memref<4x128xf32, #tpu.memory_space<vmem>>, vector<4x128xf32>
    %c0_1 = arith.constant 0 : index
    %c0_2 = arith.constant 0 : index
    %1 = vector.load %arg1[%c0_1, %c0_2] : memref<16x128xf32, #tpu.memory_space<vmem>>, vector<16x128xf32>
    %c0_3 = arith.constant 0 : index
    %c0_4 = arith.constant 0 : index
    %2 = vector.load %arg2[%c0_3, %c0_4] : memref<128x128xf32, #tpu.memory_space<vmem>>, vector<128x128xf32>
    %3 = vector.extract_strided_slice %0 {offsets = [0, 0], sizes = [1, 128], strides = [1, 1]} : vector<4x128xf32> to vector<1x128xf32>
    %cst = arith.constant dense<0.000000e+00> : vector<16x128xf32>
    %4 = tpu.matmul %1, %2, %cst {dimension_numbers = #tpu.dot_dimension_numbers<[1], [0], [0], [1], [0, 0, 1, 1], [], []>} : vector<16x128xf32>, vector<128x128xf32>, vector<16x128xf32> -> vector<16x128xf32>
    %5 = vector.broadcast %3 : vector<1x128xf32> to vector<16x128xf32>
    %6 = arith.addf %4, %5 : vector<16x128xf32>
    %cst_5 = arith.constant 0.000000e+00 : f32
    %7 = vector.broadcast %cst_5 : f32 to vector<16x128xf32>
    %8 = arith.maximumf %6, %7 : vector<16x128xf32>
    %c0_6 = arith.constant 0 : index
    %c0_7 = arith.constant 0 : index
    %c0_8 = arith.constant 0 : index
    %9 = vector.load %arg3[%c0_6, %c0_7, %c0_8] : memref<3x128x128xf32, #tpu.memory_space<vmem>>, vector<1x128x128xf32>
    %10 = vector.shape_cast %9 : vector<1x128x128xf32> to vector<128x128xf32>
    %11 = vector.extract_strided_slice %0 {offsets = [1, 0], sizes = [1, 128], strides = [1, 1]} : vector<4x128xf32> to vector<1x128xf32>
    %cst_9 = arith.constant dense<0.000000e+00> : vector<16x128xf32>
    %12 = tpu.matmul %8, %10, %cst_9 {dimension_numbers = #tpu.dot_dimension_numbers<[1], [0], [0], [1], [0, 0, 1, 1], [], []>} : vector<16x128xf32>, vector<128x128xf32>, vector<16x128xf32> -> vector<16x128xf32>
    %13 = vector.broadcast %11 : vector<1x128xf32> to vector<16x128xf32>
    %14 = arith.addf %12, %13 : vector<16x128xf32>
    %cst_10 = arith.constant 0.000000e+00 : f32
    %15 = vector.broadcast %cst_10 : f32 to vector<16x128xf32>
    %16 = arith.maximumf %14, %15 : vector<16x128xf32>
    %c1 = arith.constant 1 : index
    %c0_11 = arith.constant 0 : index
    %c0_12 = arith.constant 0 : index
    %17 = vector.load %arg3[%c1, %c0_11, %c0_12] : memref<3x128x128xf32, #tpu.memory_space<vmem>>, vector<1x128x128xf32>
    %18 = vector.shape_cast %17 : vector<1x128x128xf32> to vector<128x128xf32>
    %19 = vector.extract_strided_slice %0 {offsets = [2, 0], sizes = [1, 128], strides = [1, 1]} : vector<4x128xf32> to vector<1x128xf32>
    %cst_13 = arith.constant dense<0.000000e+00> : vector<16x128xf32>
    %20 = tpu.matmul %16, %18, %cst_13 {dimension_numbers = #tpu.dot_dimension_numbers<[1], [0], [0], [1], [0, 0, 1, 1], [], []>} : vector<16x128xf32>, vector<128x128xf32>, vector<16x128xf32> -> vector<16x128xf32>
    %21 = vector.broadcast %19 : vector<1x128xf32> to vector<16x128xf32>
    %22 = arith.addf %20, %21 : vector<16x128xf32>
    %cst_14 = arith.constant 0.000000e+00 : f32
    %23 = vector.broadcast %cst_14 : f32 to vector<16x128xf32>
    %24 = arith.maximumf %22, %23 : vector<16x128xf32>
    %c2 = arith.constant 2 : index
    %c0_15 = arith.constant 0 : index
    %c0_16 = arith.constant 0 : index
    %25 = vector.load %arg3[%c2, %c0_15, %c0_16] : memref<3x128x128xf32, #tpu.memory_space<vmem>>, vector<1x128x128xf32>
    %26 = vector.shape_cast %25 : vector<1x128x128xf32> to vector<128x128xf32>
    %27 = vector.extract_strided_slice %0 {offsets = [3, 0], sizes = [1, 128], strides = [1, 1]} : vector<4x128xf32> to vector<1x128xf32>
    %cst_17 = arith.constant dense<0.000000e+00> : vector<16x128xf32>
    %28 = tpu.matmul %24, %26, %cst_17 {dimension_numbers = #tpu.dot_dimension_numbers<[1], [0], [0], [1], [0, 0, 1, 1], [], []>} : vector<16x128xf32>, vector<128x128xf32>, vector<16x128xf32> -> vector<16x128xf32>
    %29 = vector.broadcast %27 : vector<1x128xf32> to vector<16x128xf32>
    %30 = arith.addf %28, %29 : vector<16x128xf32>
    %cst_18 = arith.constant 0.000000e+00 : f32
    %31 = vector.broadcast %cst_18 : f32 to vector<16x128xf32>
    %32 = arith.maximumf %30, %31 : vector<16x128xf32>
    %c16_i32 = arith.constant 16 : i32
    %33 = arith.muli %arg0, %c16_i32 : i32
    %34 = tpu.assume_multiple %33, 8 : i32
    %35 = arith.index_cast %34 : i32 to index
    %c0_19 = arith.constant 0 : index
    %36 = vector.load %arg8[%35, %c0_19] : memref<64x128xf32, #tpu.memory_space<vmem>>, vector<16x128xf32>
    tpu.vector_store %arg8[%35, %c0_19], %32 {strides = array<i32>} : memref<64x128xf32, #tpu.memory_space<vmem>>, vector<16x128xf32>,
    %c3_i32 = arith.constant 3 : i32
    %37 = arith.cmpi eq, %arg0, %c3_i32 : i32
    %38 = arith.extui %37 : i1 to i32
    %c0_i32 = arith.constant 0 : i32
    %39 = arith.cmpi ne, %38, %c0_i32 : i32
    scf.if %39 {
      %c0_20 = arith.constant 0 : index
      %c0_21 = arith.constant 0 : index
      %40 = vector.load %arg8[%c0_20, %c0_21] : memref<64x128xf32, #tpu.memory_space<vmem>>, vector<64x128xf32>
      %c0_22 = arith.constant 0 : index
      %c0_23 = arith.constant 0 : index
      %41 = vector.load %arg6[%c0_22, %c0_23] : memref<6x128xf32, #tpu.memory_space<vmem>>, vector<6x128xf32>
      %42 = vector.extract_strided_slice %41 {offsets = [0, 0], sizes = [1, 128], strides = [1, 1]} : vector<6x128xf32> to vector<1x128xf32>
      %43 = vector.extract_strided_slice %41 {offsets = [1, 0], sizes = [1, 128], strides = [1, 1]} : vector<6x128xf32> to vector<1x128xf32>
      %cst_24 = arith.constant dense<0.000000e+00> : vector<128xf32>
      %44 = vector.multi_reduction <add>, %40, %cst_24 [0] : vector<64x128xf32> to vector<128xf32>
      %45 = vector.shape_cast %44 : vector<128xf32> to vector<1x128xf32>
      %46 = arith.mulf %40, %40 : vector<64x128xf32>
      %cst_25 = arith.constant dense<0.000000e+00> : vector<128xf32>
      %47 = vector.multi_reduction <add>, %46, %cst_25 [0] : vector<64x128xf32> to vector<128xf32>
      %48 = vector.shape_cast %47 : vector<128xf32> to vector<1x128xf32>
      %cst_26 = arith.constant 1.562500e-02 : f32
      %49 = vector.broadcast %cst_26 : f32 to vector<1x128xf32>
      %50 = arith.mulf %45, %49 : vector<1x128xf32>
      %cst_27 = arith.constant 1.562500e-02 : f32
      %51 = vector.broadcast %cst_27 : f32 to vector<1x128xf32>
      %52 = arith.mulf %48, %51 : vector<1x128xf32>
      %53 = arith.mulf %50, %50 : vector<1x128xf32>
      %54 = arith.subf %52, %53 : vector<1x128xf32>
      %cst_28 = arith.constant 0.000000e+00 : f32
      %55 = vector.broadcast %cst_28 : f32 to vector<1x128xf32>
      %56 = arith.maximumf %54, %55 : vector<1x128xf32>
      %57 = vector.broadcast %50 : vector<1x128xf32> to vector<64x128xf32>
      %58 = arith.subf %40, %57 : vector<64x128xf32>
      %cst_29 = arith.constant 9.99999974E-6 : f32
      %59 = vector.broadcast %cst_29 : f32 to vector<1x128xf32>
      %60 = arith.addf %56, %59 : vector<1x128xf32>
      %61 = math.rsqrt %60 : vector<1x128xf32>
      %62 = vector.broadcast %61 : vector<1x128xf32> to vector<64x128xf32>
      %63 = arith.mulf %58, %62 : vector<64x128xf32>
      %64 = vector.broadcast %42 : vector<1x128xf32> to vector<64x128xf32>
      %65 = arith.mulf %64, %63 : vector<64x128xf32>
      %66 = vector.broadcast %43 : vector<1x128xf32> to vector<64x128xf32>
      %67 = arith.addf %65, %66 : vector<64x128xf32>
      %c0_30 = arith.constant 0 : index
      %c0_31 = arith.constant 0 : index
      %c0_32 = arith.constant 0 : index
      %68 = vector.load %arg5[%c0_30, %c0_31, %c0_32] : memref<2x128x128xf32, #tpu.memory_space<vmem>>, vector<1x128x128xf32>
      %69 = vector.shape_cast %68 : vector<1x128x128xf32> to vector<128x128xf32>
      %cst_33 = arith.constant dense<0.000000e+00> : vector<64x128xf32>
      %70 = tpu.matmul %67, %69, %cst_33 {dimension_numbers = #tpu.dot_dimension_numbers<[1], [0], [0], [1], [0, 0, 1, 1], [], []>} : vector<64x128xf32>, vector<128x128xf32>, vector<64x128xf32> -> vector<64x128xf32>
      %71 = vector.extract_strided_slice %41 {offsets = [4, 0], sizes = [1, 128], strides = [1, 1]} : vector<6x128xf32> to vector<1x128xf32>
      %72 = vector.broadcast %71 : vector<1x128xf32> to vector<64x128xf32>
      %73 = arith.addf %70, %72 : vector<64x128xf32>
      %cst_34 = arith.constant 0.000000e+00 : f32
      %74 = vector.broadcast %cst_34 : f32 to vector<64x128xf32>
      %75 = arith.maximumf %73, %74 : vector<64x128xf32>
      %76 = vector.extract_strided_slice %41 {offsets = [2, 0], sizes = [1, 128], strides = [1, 1]} : vector<6x128xf32> to vector<1x128xf32>
      %77 = vector.extract_strided_slice %41 {offsets = [3, 0], sizes = [1, 128], strides = [1, 1]} : vector<6x128xf32> to vector<1x128xf32>
      %cst_35 = arith.constant dense<0.000000e+00> : vector<128xf32>
      %78 = vector.multi_reduction <add>, %75, %cst_35 [0] : vector<64x128xf32> to vector<128xf32>
      %79 = vector.shape_cast %78 : vector<128xf32> to vector<1x128xf32>
      %80 = arith.mulf %75, %75 : vector<64x128xf32>
      %cst_36 = arith.constant dense<0.000000e+00> : vector<128xf32>
      %81 = vector.multi_reduction <add>, %80, %cst_36 [0] : vector<64x128xf32> to vector<128xf32>
      %82 = vector.shape_cast %81 : vector<128xf32> to vector<1x128xf32>
      %cst_37 = arith.constant 1.562500e-02 : f32
      %83 = vector.broadcast %cst_37 : f32 to vector<1x128xf32>
      %84 = arith.mulf %79, %83 : vector<1x128xf32>
      %cst_38 = arith.constant 1.562500e-02 : f32
      %85 = vector.broadcast %cst_38 : f32 to vector<1x128xf32>
      %86 = arith.mulf %82, %85 : vector<1x128xf32>
      %87 = arith.mulf %84, %84 : vector<1x128xf32>
      %88 = arith.subf %86, %87 : vector<1x128xf32>
      %cst_39 = arith.constant 0.000000e+00 : f32
      %89 = vector.broadcast %cst_39 : f32 to vector<1x128xf32>
      %90 = arith.maximumf %88, %89 : vector<1x128xf32>
      %91 = vector.broadcast %84 : vector<1x128xf32> to vector<64x128xf32>
      %92 = arith.subf %75, %91 : vector<64x128xf32>
      %cst_40 = arith.constant 9.99999974E-6 : f32
      %93 = vector.broadcast %cst_40 : f32 to vector<1x128xf32>
      %94 = arith.addf %90, %93 : vector<1x128xf32>
      %95 = math.rsqrt %94 : vector<1x128xf32>
      %96 = vector.broadcast %95 : vector<1x128xf32> to vector<64x128xf32>
      %97 = arith.mulf %92, %96 : vector<64x128xf32>
      %98 = vector.broadcast %76 : vector<1x128xf32> to vector<64x128xf32>
      %99 = arith.mulf %98, %97 : vector<64x128xf32>
      %100 = vector.broadcast %77 : vector<1x128xf32> to vector<64x128xf32>
      %101 = arith.addf %99, %100 : vector<64x128xf32>
      %c1_41 = arith.constant 1 : index
      %c0_42 = arith.constant 0 : index
      %c0_43 = arith.constant 0 : index
      %102 = vector.load %arg5[%c1_41, %c0_42, %c0_43] : memref<2x128x128xf32, #tpu.memory_space<vmem>>, vector<1x128x128xf32>
      %103 = vector.shape_cast %102 : vector<1x128x128xf32> to vector<128x128xf32>
      %cst_44 = arith.constant dense<0.000000e+00> : vector<64x128xf32>
      %104 = tpu.matmul %101, %103, %cst_44 {dimension_numbers = #tpu.dot_dimension_numbers<[1], [0], [0], [1], [0, 0, 1, 1], [], []>} : vector<64x128xf32>, vector<128x128xf32>, vector<64x128xf32> -> vector<64x128xf32>
      %105 = vector.extract_strided_slice %41 {offsets = [5, 0], sizes = [1, 128], strides = [1, 1]} : vector<6x128xf32> to vector<1x128xf32>
      %106 = vector.broadcast %105 : vector<1x128xf32> to vector<64x128xf32>
      %107 = arith.addf %104, %106 : vector<64x128xf32>
      %108 = tpu.iota {dimensions = array<i32: 1>} : vector<64x128xi32>
      %c3_i32_45 = arith.constant 3 : i32
      %109 = vector.broadcast %c3_i32_45 : i32 to vector<64x128xi32>
      %110 = arith.cmpi slt, %108, %109 : vector<64x128xi32>
      %cst_46 = arith.constant -1.000000e+30 : f32
      %111 = vector.broadcast %cst_46 : f32 to vector<64x128xf32>
      %112 = arith.select %110, %107, %111 : vector<64x128xi1>, vector<64x128xf32>
      %cst_47 = arith.constant dense<0xFF800000> : vector<64xf32>
      %113 = vector.multi_reduction <maximumf>, %112, %cst_47 [1] : vector<64x128xf32> to vector<64xf32>
      %114 = vector.shape_cast %113 : vector<64xf32> to vector<64x1xf32>
      %115 = vector.broadcast %114 : vector<64x1xf32> to vector<64x128xf32>
      %116 = arith.subf %112, %115 : vector<64x128xf32>
      %117 = math.exp %116 : vector<64x128xf32>
      %cst_48 = arith.constant 0.000000e+00 : f32
      %118 = vector.broadcast %cst_48 : f32 to vector<64x128xf32>
      %119 = arith.select %110, %117, %118 : vector<64x128xi1>, vector<64x128xf32>
      %cst_49 = arith.constant dense<0.000000e+00> : vector<64xf32>
      %120 = vector.multi_reduction <add>, %119, %cst_49 [1] : vector<64x128xf32> to vector<64xf32>
      %121 = vector.shape_cast %120 : vector<64xf32> to vector<64x1xf32>
      %122 = tpu.reciprocal %121 : vector<64x1xf32> -> vector<64x1xf32>
      %123 = vector.broadcast %122 : vector<64x1xf32> to vector<64x128xf32>
      %124 = arith.mulf %119, %123 : vector<64x128xf32>
      %c0_50 = arith.constant 0 : index
      %c0_51 = arith.constant 0 : index
      %125 = vector.load %arg7[%c0_50, %c0_51] : memref<64x128xf32, #tpu.memory_space<vmem>>, vector<64x128xf32>
      tpu.vector_store %arg7[%c0_50, %c0_51], %124 {strides = array<i32>} : memref<64x128xf32, #tpu.memory_space<vmem>>, vector<64x128xf32>,
    } else {
    }
    return
  }
  func.func @transform_0(%arg0: i32) -> (i32, i32) {
    %c0_i32 = arith.constant 0 : i32
    %c0_i32_0 = arith.constant 0 : i32
    return %arg0, %c0_i32 : i32, i32
  }
  func.func @transform_1(%arg0: i32) -> (i32, i32) {
    %c0_i32 = arith.constant 0 : i32
    %c0_i32_0 = arith.constant 0 : i32
    %c0_i32_1 = arith.constant 0 : i32
    return %c0_i32, %c0_i32_0 : i32, i32
  }
  func.func @transform_2(%arg0: i32) -> (i32, i32, i32) {
    %c0_i32 = arith.constant 0 : i32
    %c0_i32_0 = arith.constant 0 : i32
    %c0_i32_1 = arith.constant 0 : i32
    %c0_i32_2 = arith.constant 0 : i32
    return %c0_i32, %c0_i32_0, %c0_i32_1 : i32, i32, i32
  }
  func.func @transform_3(%arg0: i32) -> (i32, i32) {
    %c0_i32 = arith.constant 0 : i32
    %c0_i32_0 = arith.constant 0 : i32
    %c0_i32_1 = arith.constant 0 : i32
    return %c0_i32, %c0_i32_0 : i32, i32
  }
  func.func @transform_4(%arg0: i32) -> (i32, i32, i32) {
    %c0_i32 = arith.constant 0 : i32
    %c0_i32_0 = arith.constant 0 : i32
    %c0_i32_1 = arith.constant 0 : i32
    %c0_i32_2 = arith.constant 0 : i32
    return %c0_i32, %c0_i32_0, %c0_i32_1 : i32, i32, i32
  }
  func.func @transform_5(%arg0: i32) -> (i32, i32) {
    %c0_i32 = arith.constant 0 : i32
    %c0_i32_0 = arith.constant 0 : i32
    %c0_i32_1 = arith.constant 0 : i32
    return %c0_i32, %c0_i32_0 : i32, i32
  }
  func.func @transform_6(%arg0: i32) -> (i32, i32) {
    %c0_i32 = arith.constant 0 : i32
    %c0_i32_0 = arith.constant 0 : i32
    %c0_i32_1 = arith.constant 0 : i32
    return %c0_i32, %c0_i32_0 : i32, i32
  }
}

</mosaic_0001>

<llo_original>
// kernel: dnn_forward.1
$region0: #{dnn_forward.1}
  #allocation0 [shape = 'u32[]', space=smem, size = 0x4, offset = 0x4, fixed_abs, tag = 'smem constant byte address 0x4 - core index']
  #allocation1 [shape = 'u32[144,128]{1,0:T(1,128)}', space=vmem, size = 0x12000, scoped, tag = 'internal scratch']
  #allocation2 [shape = 'f32[64,128]{1,0:T(8,128)}', space=vmem, size = 0x8000, scoped, tag = 'scratch operand']
  %s0 = inlined_call_operand.vmem [shape: f32[64,128], index: 0, kind: input, shape index: {}]
  %s1 = inlined_call_operand.vmem [shape: f32[128,128], index: 1, kind: input, shape index: {}]
  %s2 = inlined_call_operand.vmem [shape: f32[3,128,128], index: 2, kind: input, shape index: {}]
  %s3 = inlined_call_operand.vmem [shape: f32[4,128], index: 3, kind: input, shape index: {}]
  %s4 = inlined_call_operand.vmem [shape: f32[2,128,128], index: 4, kind: input, shape index: {}]
  %s5 = inlined_call_operand.vmem [shape: f32[6,128], index: 5, kind: input, shape index: {}]
  %s6 = inlined_call_operand.vmem [shape: f32[64,128], index: 6, kind: output, shape index: {}]
  %s7 = sld [smem:[#allocation0]]
  $region61: #{dnn_forward.1} parent=0
    _
  %s9 = ssub.s32 1, %s7
  %s10 = scalar_select 0, %s9, %s7
  loop: start=0, step=1, limit=6
  $region2: #{dnn_forward.1} parent=0 // loop_pre_header
    _
  $region3: #{dnn_forward.1} parent=0 // loop_header
    %s12 = sphi 0, %s16
    %p13 = scmp.ge.s32.totalorder %s12, 6
    %s22 = sphi 0, %s24
    %s25 = sphi 0, %s22
    %s26 = sphi 0, %s25
    %s42 = sphi 0, %s26
    %s46 = sphi 0, %s46
    %s48 = sphi 0, %s46
    %s49 = sphi 0, %s48
    %s63 = sphi 0, %s49
    %s67 = sphi 0, %s67
    %s69 = sphi 0, %s67
    %s70 = sphi 0, %s69
    %s84 = sphi 0, %s70
    %s88 = sphi 0, %s88
    %s90 = sphi 0, %s88
    %s91 = sphi 0, %s90
    %s105 = sphi 0, %s91
    %s109 = sphi 0, %s109
    %s111 = sphi 0, %s109
    %s112 = sphi 0, %s111
    %s126 = sphi 0, %s112
    %s130 = sphi 0, %s130
    %s132 = sphi 0, %s130
    %s133 = sphi 0, %s132
    %s147 = sphi 0, %s133
    %s151 = sphi 0, %s151
    %s153 = sphi 0, %s151
    %s154 = sphi 0, %s153
    %s168 = sphi 0, %s154
  $region4: #{dnn_forward.1} parent=0 // loop_header_branch
    %15 = sbr.rel (%p13) target = $region8
  $region5: #{dnn_forward.1} parent=0 // loop_body
    %s17 = ssub.s32 %s12, 1
    %s18 = ssub.s32 %s12, 2
    %s19 = sadd.s32 %s12, 1
    %s20 = ssub.s32 %s12, %s19
    %p21 = scmp.eq.s32.totalorder %s20, 0
    %s23 = sadd.s32 %s22, 1
    %s24 = scalar_select %p21, %s22, %s23
    %p27 = pneg %p21
    %p28 = scmp.eq.s32.totalorder %s12, 3
    %p29 = por %p27, %p28
    %p30 = scmp.ne.s32.totalorder %s22, %s25
    %p31 = scmp.eq.s32.totalorder %s12, 0
    %p32 = por %p30, %p31
    %p33 = scmp.ne.s32.totalorder %s22, %s25
    %p34 = scmp.eq.s32.totalorder %s17, 3
    %p35 = por %p33, %p34
    %p36 = scmp.ne.s32.totalorder %s25, %s26
    %p37 = scmp.eq.s32.totalorder %s17, 0
    %p38 = por %p36, %p37
    %p39 = scmp.ne.s32.totalorder %s25, %s26
    %p40 = scmp.eq.s32.totalorder %s18, 3
    %p41 = por %p39, %p40
    %p43 = scmp.ne.s32.totalorder %s26, %s42
    %p44 = scmp.eq.s32.totalorder %s18, 0
    %p45 = por %p43, %p44
    %s47 = sadd.s32 %s46, 1
    %p50 = scmp.eq.s32.totalorder %s12, 3
    %p51 = scmp.ne.s32.totalorder %s46, %s48
    %p52 = scmp.eq.s32.totalorder %s12, 0
    %p53 = por %p51, %p52
    %p54 = scmp.ne.s32.totalorder %s46, %s48
    %p55 = scmp.eq.s32.totalorder %s17, 3
    %p56 = por %p54, %p55
    %p57 = scmp.ne.s32.totalorder %s48, %s49
    %p58 = scmp.eq.s32.totalorder %s17, 0
    %p59 = por %p57, %p58
    %p60 = scmp.ne.s32.totalorder %s48, %s49
    %p61 = scmp.eq.s32.totalorder %s18, 3
    %p62 = por %p60, %p61
    %p64 = scmp.ne.s32.totalorder %s49, %s63
    %p65 = scmp.eq.s32.totalorder %s18, 0
    %p66 = por %p64, %p65
    %s68 = sadd.s32 %s67, 1
    %p71 = scmp.eq.s32.totalorder %s12, 3
    %p72 = scmp.ne.s32.totalorder %s67, %s69
    %p73 = scmp.eq.s32.totalorder %s12, 0
    %p74 = por %p72, %p73
    %p75 = scmp.ne.s32.totalorder %s67, %s69
    %p76 = scmp.eq.s32.totalorder %s17, 3
    %p77 = por %p75, %p76
    %p78 = scmp.ne.s32.totalorder %s69, %s70
    %p79 = scmp.eq.s32.totalorder %s17, 0
    %p80 = por %p78, %p79
    %p81 = scmp.ne.s32.totalorder %s69, %s70
    %p82 = scmp.eq.s32.totalorder %s18, 3
    %p83 = por %p81, %p82
    %p85 = scmp.ne.s32.totalorder %s70, %s84
    %p86 = scmp.eq.s32.totalorder %s18, 0
    %p87 = por %p85, %p86
    %s89 = sadd.s32 %s88, 1
    %p92 = scmp.eq.s32.totalorder %s12, 3
    %p93 = scmp.ne.s32.totalorder %s88, %s90
    %p94 = scmp.eq.s32.totalorder %s12, 0
    %p95 = por %p93, %p94
    %p96 = scmp.ne.s32.totalorder %s88, %s90
    %p97 = scmp.eq.s32.totalorder %s17, 3
    %p98 = por %p96, %p97
    %p99 = scmp.ne.s32.totalorder %s90, %s91
    %p100 = scmp.eq.s32.totalorder %s17, 0
    %p101 = por %p99, %p100
    %p102 = scmp.ne.s32.totalorder %s90, %s91
    %p103 = scmp.eq.s32.totalorder %s18, 3
    %p104 = por %p102, %p103
    %p106 = scmp.ne.s32.totalorder %s91, %s105
    %p107 = scmp.eq.s32.totalorder %s18, 0
    %p108 = por %p106, %p107
    %s110 = sadd.s32 %s109, 1
    %p113 = scmp.eq.s32.totalorder %s12, 3
    %p114 = scmp.ne.s32.totalorder %s109, %s111
    %p115 = scmp.eq.s32.totalorder %s12, 0
    %p116 = por %p114, %p115
    %p117 = scmp.ne.s32.totalorder %s109, %s111
    %p118 = scmp.eq.s32.totalorder %s17, 3
    %p119 = por %p117, %p118
    %p120 = scmp.ne.s32.totalorder %s111, %s112
    %p121 = scmp.eq.s32.totalorder %s17, 0
    %p122 = por %p120, %p121
    %p123 = scmp.ne.s32.totalorder %s111, %s112
    %p124 = scmp.eq.s32.totalorder %s18, 3
    %p125 = por %p123, %p124
    %p127 = scmp.ne.s32.totalorder %s112, %s126
    %p128 = scmp.eq.s32.totalorder %s18, 0
    %p129 = por %p127, %p128
    %s131 = sadd.s32 %s130, 1
    %p134 = scmp.eq.s32.totalorder %s12, 3
    %p135 = scmp.ne.s32.totalorder %s130, %s132
    %p136 = scmp.eq.s32.totalorder %s12, 0
    %p137 = por %p135, %p136
    %p138 = scmp.ne.s32.totalorder %s130, %s132
    %p139 = scmp.eq.s32.totalorder %s17, 3
    %p140 = por %p138, %p139
    %p141 = scmp.ne.s32.totalorder %s132, %s133
    %p142 = scmp.eq.s32.totalorder %s17, 0
    %p143 = por %p141, %p142
    %p144 = scmp.ne.s32.totalorder %s132, %s133
    %p145 = scmp.eq.s32.totalorder %s18, 3
    %p146 = por %p144, %p145
    %p148 = scmp.ne.s32.totalorder %s133, %s147
    %p149 = scmp.eq.s32.totalorder %s18, 0
    %p150 = por %p148, %p149
    %s152 = sadd.s32 %s151, 1
    %p155 = scmp.eq.s32.totalorder %s12, 3
    %p156 = scmp.ne.s32.totalorder %s151, %s153
    %p157 = scmp.eq.s32.totalorder %s12, 0
    %p158 = por %p156, %p157
    %p159 = scmp.ne.s32.totalorder %s151, %s153
    %p160 = scmp.eq.s32.totalorder %s17, 3
    %p161 = por %p159, %p160
    %p162 = scmp.ne.s32.totalorder %s153, %s154
    %p163 = scmp.eq.s32.totalorder %s17, 0
    %p164 = por %p162, %p163
    %p165 = scmp.ne.s32.totalorder %s153, %s154
    %p166 = scmp.eq.s32.totalorder %s18, 3
    %p167 = por %p165, %p166
    %p169 = scmp.ne.s32.totalorder %s154, %s168
    %p170 = scmp.eq.s32.totalorder %s18, 0
    %p171 = por %p169, %p170
    %p172 = scmp.le.s32.totalorder 1, %s12
    %p173 = scmp.lt.s32.totalorder %s12, 5
    %p174 = pnand %p172, %p173
    %p175 = pneg %p174
    // Predicated region
    $region9: #{dnn_forward.1} parent=5 // pred_check
      _
    $region10: #{dnn_forward.1} parent=5 // pred_check_branch
      %177 = sbr.rel (%p174) target = $region12
    $region11: #{dnn_forward.1} parent=5 // pred_region
      %s178 = ssub.s32 %s12, 1
      // Predicated region
      $region13: #{dnn_forward.1} parent=11 // pred_check
        %p179 = pneg %p59
      $region14: #{dnn_forward.1} parent=11 // pred_check_branch
        %181 = sbr.rel (%p179) target = $region16
      $region15: #{dnn_forward.1} parent=11 // pred_region
        _
      $region16: #{dnn_forward.1} parent=11 // pred_fallthru
        _
      // Predicated region
      $region17: #{dnn_forward.1} parent=11 // pred_check
        %p182 = pneg %p80
      $region18: #{dnn_forward.1} parent=11 // pred_check_branch
        %184 = sbr.rel (%p182) target = $region20
      $region19: #{dnn_forward.1} parent=11 // pred_region
        _
      $region20: #{dnn_forward.1} parent=11 // pred_fallthru
        _
      // Predicated region
      $region21: #{dnn_forward.1} parent=11 // pred_check
        %p185 = pneg %p101
      $region22: #{dnn_forward.1} parent=11 // pred_check_branch
        %187 = sbr.rel (%p185) target = $region24
      $region23: #{dnn_forward.1} parent=11 // pred_region
        _
      $region24: #{dnn_forward.1} parent=11 // pred_fallthru
        _
      // Predicated region
      $region25: #{dnn_forward.1} parent=11 // pred_check
        %p188 = pneg %p122
      $region26: #{dnn_forward.1} parent=11 // pred_check_branch
        %190 = sbr.rel (%p188) target = $region28
      $region27: #{dnn_forward.1} parent=11 // pred_region
        _
      $region28: #{dnn_forward.1} parent=11 // pred_fallthru
        _
      // Predicated region
      $region29: #{dnn_forward.1} parent=11 // pred_check
        %p191 = pneg %p143
      $region30: #{dnn_forward.1} parent=11 // pred_check_branch
        %193 = sbr.rel (%p191) target = $region32
      $region31: #{dnn_forward.1} parent=11 // pred_region
        _
      $region32: #{dnn_forward.1} parent=11 // pred_fallthru
        _
    $region12: #{dnn_forward.1} parent=5 // pred_fallthru
      _
    %p194 = scmp.lt.s32.totalorder %s12, 4
    // Predicated region
    $region33: #{dnn_forward.1} parent=5 // pred_check
      %p195 = pneg %p194
    $region34: #{dnn_forward.1} parent=5 // pred_check_branch
      %197 = sbr.rel (%p195) target = $region36
    $region35: #{dnn_forward.1} parent=5 // pred_region
      // Predicated region
      $region37: #{dnn_forward.1} parent=35 // pred_check
        %p198 = pneg %p32
      $region38: #{dnn_forward.1} parent=35 // pred_check_branch
        %200 = sbr.rel (%p198) target = $region40
      $region39: #{dnn_forward.1} parent=35 // pred_region
        %s201 = smul.u32 2, %s12
        %p202 = scmp.lt.s32.totalorder %s201, 7
        %s203 = scalar_select %p202, %s201, 7
        %s204 = smul.addr %s203, 8
        %s205 = scalar_lea.vmem %s0, %s204
        %s206 = smul.u32 2, %s12
      $region40: #{dnn_forward.1} parent=35 // pred_fallthru
        _
    $region36: #{dnn_forward.1} parent=5 // pred_fallthru
      _
    %p207 = scmp.le.s32.totalorder 1, %s12
    %p208 = scmp.lt.s32.totalorder %s12, 5
    %p209 = pnand %p207, %p208
    %p210 = pneg %p209
    // Predicated region
    $region41: #{dnn_forward.1} parent=5 // pred_check
      _
    $region42: #{dnn_forward.1} parent=5 // pred_check_branch
      %212 = sbr.rel (%p209) target = $region44
    $region43: #{dnn_forward.1} parent=5 // pred_region
      %s213 = ssub.s32 %s12, 1
      %s214 = smul.u32 2, %s17
      %p215 = scmp.lt.s32.totalorder %s214, 7
      %s216 = scalar_select %p215, %s214, 7
      %s217 = smul.addr %s216, 8
      %s218 = scalar_lea.vmem %s0, %s217
      %p219 = pneg %p38
      %p220 = pneg %p35
      %p221 = pneg %p59
      %p222 = pneg %p56
      %p223 = pneg %p80
      %p224 = pneg %p77
      %p225 = pneg %p101
      %p226 = pneg %p98
      %p227 = pneg %p122
      %p228 = pneg %p119
      %p229 = pneg %p143
      %p230 = pneg %p140
      %p231 = pneg %p164
      %p232 = pneg %p161
      %s233 = smul.u32 2, %s17
      %p234 = scmp.lt.s32.totalorder %s233, 7
      %s235 = scalar_select %p234, %s233, 7
      %s236 = smul.addr %s235, 8
      %s237 = scalar_lea.vmem %s0, %s236
      %s238 = smul.u32 2, %s17
      %v239 = vld [vmem:[%s3] sm:$0xf]
      %v240 = vld [vmem:[%s237] sm:$0xff]
      %v241 = vld [vmem:[%s237 + $0x8] sm:$0xff]
      %v242 = vld [vmem:[%s1] sm:$0xff]
      %v243 = vld [vmem:[%s1 + $0x8] sm:$0xff]
      %v244 = vld [vmem:[%s1 + $0x10] sm:$0xff]
      %v245 = vld [vmem:[%s1 + $0x18] sm:$0xff]
      %v246 = vld [vmem:[%s1 + $0x20] sm:$0xff]
      %v247 = vld [vmem:[%s1 + $0x28] sm:$0xff]
      %v248 = vld [vmem:[%s1 + $0x30] sm:$0xff]
      %v249 = vld [vmem:[%s1 + $0x38] sm:$0xff]
      %v250 = vld [vmem:[%s1 + $0x40] sm:$0xff]
      %v251 = vld [vmem:[%s1 + $0x48] sm:$0xff]
      %v252 = vld [vmem:[%s1 + $0x50] sm:$0xff]
      %v253 = vld [vmem:[%s1 + $0x58] sm:$0xff]
      %v254 = vld [vmem:[%s1 + $0x60] sm:$0xff]
      %v255 = vld [vmem:[%s1 + $0x68] sm:$0xff]
      %v256 = vld [vmem:[%s1 + $0x70] sm:$0xff]
      %v257 = vld [vmem:[%s1 + $0x78] sm:$0xff]
      %v258 = vlaneseq
      %v259 = vshrl.u32 %v258, 7
      %v260 = vsub.s32 0, %v259
      %v261 = vrot.slane %v239, %v260
      %262 = vmatprep.subr.mxu0 0.0
      %263 = vmatpush1.msra.mxu0 %v242
      %264 = vmatprep.subr.mxu0 0.0
      %265 = vmatpush1.msra.mxu0 %v243
      %266 = vmatprep.subr.mxu0 0.0
      %267 = vmatpush1.msra.mxu0 %v244
      %268 = vmatprep.subr.mxu0 0.0
      %269 = vmatpush1.msra.mxu0 %v245
      %270 = vmatprep.subr.mxu0 0.0
      %271 = vmatpush1.msra.mxu0 %v246
      %272 = vmatprep.subr.mxu0 0.0
      %273 = vmatpush1.msra.mxu0 %v247
      %274 = vmatprep.subr.mxu0 0.0
      %275 = vmatpush1.msra.mxu0 %v248
      %276 = vmatprep.subr.mxu0 0.0
      %277 = vmatpush1.msra.mxu0 %v249
      %278 = vmatprep.subr.mxu0 0.0
      %279 = vmatpush1.msra.mxu0 %v250
      %280 = vmatprep.subr.mxu0 0.0
      %281 = vmatpush1.msra.mxu0 %v251
      %282 = vmatprep.subr.mxu0 0.0
      %283 = vmatpush1.msra.mxu0 %v252
      %284 = vmatprep.subr.mxu0 0.0
      %285 = vmatpush1.msra.mxu0 %v253
      %286 = vmatprep.subr.mxu0 0.0
      %287 = vmatpush1.msra.mxu0 %v254
      %288 = vmatprep.subr.mxu0 0.0
      %289 = vmatpush1.msra.mxu0 %v255
      %290 = vmatprep.subr.mxu0 0.0
      %291 = vmatpush1.msra.mxu0 %v256
      %292 = vmatprep.subr.mxu0 0.0
      %293 = vmatpush1.msra.mxu0 %v257
      %294 = vmatprep.subr.mxu0 0.0
      %295 = vmatpush1.msra.mxu0 0.0
      %296 = vmatprep.subr.mxu0 0.0
      %297 = vmatpush1.msra.mxu0 0.0
      %298 = vmatprep.subr.mxu0 0.0
      %299 = vmatpush1.msra.mxu0 0.0
      %300 = vmatprep.subr.mxu0 0.0
      %301 = vmatpush1.msra.mxu0 0.0
      %302 = vmatprep.subr.mxu0 0.0
      %303 = vmatpush1.msra.mxu0 0.0
      %304 = vmatprep.subr.mxu0 0.0
      %305 = vmatpush1.msra.mxu0 0.0
      %306 = vmatprep.subr.mxu0 0.0
      %307 = vmatpush1.msra.mxu0 0.0
      %308 = vmatprep.subr.mxu0 0.0
      %309 = vmatpush1.msra.mxu0 0.0
      %310 = vmatprep.subr.mxu0 0.0
      %311 = vmatpush1.msra.mxu0 0.0
      %312 = vmatprep.subr.mxu0 0.0
      %313 = vmatpush1.msra.mxu0 0.0
      %314 = vmatprep.subr.mxu0 0.0
      %315 = vmatpush1.msra.mxu0 0.0
      %316 = vmatprep.subr.mxu0 0.0
      %317 = vmatpush1.msra.mxu0 0.0
      %318 = vmatprep.subr.mxu0 0.0
      %319 = vmatpush1.msra.mxu0 0.0
      %320 = vmatprep.subr.mxu0 0.0
      %321 = vmatpush1.msra.mxu0 0.0
      %322 = vmatprep.subr.mxu0 0.0
      %323 = vmatpush1.msra.mxu0 0.0
      %324 = vmatprep.subr.mxu0 0.0
      %325 = vmatpush1.msra.mxu0 0.0
      %326 = vmatprep.mubr.f32.mxu0 0.0
      %327 = vmatmul.mubr.f32.gmra.mrb[0].mxu0 %v240
      %v328 = vpop.f32.mrb[0].mxu0
      %v329 = vadd.f32 %v261, %v328
      %v330 = vpop.f32.mrb[0].mxu0
      %331 = vmatprep.mubr.f32.mxu0 0.0
      %332 = vmatmul.mubr.f32.gmra.mrb[0].mxu0 %v241
      %v333 = vpop.f32.mrb[0].mxu0
      %v334 = vadd.f32 %v261, %v333
      %v335 = vpop.f32.mrb[0].mxu0
      %336 = vdwg.mxu0
      %v337 = vmax.f32 %v329, 0.0
      %v338 = vmax.f32 %v334, 0.0
      %v339 = vld [vmem:[%s2] sm:$0xff]
      %v340 = vld [vmem:[%s2 + $0x8] sm:$0xff]
      %v341 = vld [vmem:[%s2 + $0x10] sm:$0xff]
      %v342 = vld [vmem:[%s2 + $0x18] sm:$0xff]
      %v343 = vld [vmem:[%s2 + $0x20] sm:$0xff]
      %v344 = vld [vmem:[%s2 + $0x28] sm:$0xff]
      %v345 = vld [vmem:[%s2 + $0x30] sm:$0xff]
      %v346 = vld [vmem:[%s2 + $0x38] sm:$0xff]
      %v347 = vld [vmem:[%s2 + $0x40] sm:$0xff]
      %v348 = vld [vmem:[%s2 + $0x48] sm:$0xff]
      %v349 = vld [vmem:[%s2 + $0x50] sm:$0xff]
      %v350 = vld [vmem:[%s2 + $0x58] sm:$0xff]
      %v351 = vld [vmem:[%s2 + $0x60] sm:$0xff]
      %v352 = vld [vmem:[%s2 + $0x68] sm:$0xff]
      %v353 = vld [vmem:[%s2 + $0x70] sm:$0xff]
      %v354 = vld [vmem:[%s2 + $0x78] sm:$0xff]
      %v355 = vlaneseq
      %v356 = vshrl.u32 %v355, 7
      %v357 = vsub.s32 1, %v356
      %v358 = vrot.slane %v239, %v357
      %359 = vmatprep.subr.mxu0 0.0
      %360 = vmatpush1.msra.mxu0 %v339
      %361 = vmatprep.subr.mxu0 0.0
      %362 = vmatpush1.msra.mxu0 %v340
      %363 = vmatprep.subr.mxu0 0.0
      %364 = vmatpush1.msra.mxu0 %v341
      %365 = vmatprep.subr.mxu0 0.0
      %366 = vmatpush1.msra.mxu0 %v342
      %367 = vmatprep.subr.mxu0 0.0
      %368 = vmatpush1.msra.mxu0 %v343
      %369 = vmatprep.subr.mxu0 0.0
      %370 = vmatpush1.msra.mxu0 %v344
      %371 = vmatprep.subr.mxu0 0.0
      %372 = vmatpush1.msra.mxu0 %v345
      %373 = vmatprep.subr.mxu0 0.0
      %374 = vmatpush1.msra.mxu0 %v346
      %375 = vmatprep.subr.mxu0 0.0
      %376 = vmatpush1.msra.mxu0 %v347
      %377 = vmatprep.subr.mxu0 0.0
      %378 = vmatpush1.msra.mxu0 %v348
      %379 = vmatprep.subr.mxu0 0.0
      %380 = vmatpush1.msra.mxu0 %v349
      %381 = vmatprep.subr.mxu0 0.0
      %382 = vmatpush1.msra.mxu0 %v350
      %383 = vmatprep.subr.mxu0 0.0
      %384 = vmatpush1.msra.mxu0 %v351
      %385 = vmatprep.subr.mxu0 0.0
      %386 = vmatpush1.msra.mxu0 %v352
      %387 = vmatprep.subr.mxu0 0.0
      %388 = vmatpush1.msra.mxu0 %v353
      %389 = vmatprep.subr.mxu0 0.0
      %390 = vmatpush1.msra.mxu0 %v354
      %391 = vmatprep.subr.mxu0 0.0
      %392 = vmatpush1.msra.mxu0 0.0
      %393 = vmatprep.subr.mxu0 0.0
      %394 = vmatpush1.msra.mxu0 0.0
      %395 = vmatprep.subr.mxu0 0.0
      %396 = vmatpush1.msra.mxu0 0.0
      %397 = vmatprep.subr.mxu0 0.0
      %398 = vmatpush1.msra.mxu0 0.0
      %399 = vmatprep.subr.mxu0 0.0
      %400 = vmatpush1.msra.mxu0 0.0
      %401 = vmatprep.subr.mxu0 0.0
      %402 = vmatpush1.msra.mxu0 0.0
      %403 = vmatprep.subr.mxu0 0.0
      %404 = vmatpush1.msra.mxu0 0.0
      %405 = vmatprep.subr.mxu0 0.0
      %406 = vmatpush1.msra.mxu0 0.0
      %407 = vmatprep.subr.mxu0 0.0
      %408 = vmatpush1.msra.mxu0 0.0
      %409 = vmatprep.subr.mxu0 0.0
      %410 = vmatpush1.msra.mxu0 0.0
      %411 = vmatprep.subr.mxu0 0.0
      %412 = vmatpush1.msra.mxu0 0.0
      %413 = vmatprep.subr.mxu0 0.0
      %414 = vmatpush1.msra.mxu0 0.0
      %415 = vmatprep.subr.mxu0 0.0
      %416 = vmatpush1.msra.mxu0 0.0
      %417 = vmatprep.subr.mxu0 0.0
      %418 = vmatpush1.msra.mxu0 0.0
      %419 = vmatprep.subr.mxu0 0.0
      %420 = vmatpush1.msra.mxu0 0.0
      %421 = vmatprep.subr.mxu0 0.0
      %422 = vmatpush1.msra.mxu0 0.0
      %423 = vmatprep.mubr.f32.mxu0 0.0
      %424 = vmatmul.mubr.f32.gmra.mrb[0].mxu0 %v337
      %v425 = vpop.f32.mrb[0].mxu0
      %v426 = vadd.f32 %v358, %v425
      %v427 = vpop.f32.mrb[0].mxu0
      %428 = vmatprep.mubr.f32.mxu0 0.0
      %429 = vmatmul.mubr.f32.gmra.mrb[0].mxu0 %v338
      %v430 = vpop.f32.mrb[0].mxu0
      %v431 = vadd.f32 %v358, %v430
      %v432 = vpop.f32.mrb[0].mxu0
      %433 = vdwg.mxu0
      %v434 = vmax.f32 %v426, 0.0
      %v435 = vmax.f32 %v431, 0.0
      %s436 = scalar_lea.vmem %s2, 128
      %v437 = vld [vmem:[%s436] sm:$0xff]
      %v438 = vld [vmem:[%s436 + $0x8] sm:$0xff]
      %v439 = vld [vmem:[%s436 + $0x10] sm:$0xff]
      %v440 = vld [vmem:[%s436 + $0x18] sm:$0xff]
      %v441 = vld [vmem:[%s436 + $0x20] sm:$0xff]
      %v442 = vld [vmem:[%s436 + $0x28] sm:$0xff]
      %v443 = vld [vmem:[%s436 + $0x30] sm:$0xff]
      %v444 = vld [vmem:[%s436 + $0x38] sm:$0xff]
      %v445 = vld [vmem:[%s436 + $0x40] sm:$0xff]
      %v446 = vld [vmem:[%s436 + $0x48] sm:$0xff]
      %v447 = vld [vmem:[%s436 + $0x50] sm:$0xff]
      %v448 = vld [vmem:[%s436 + $0x58] sm:$0xff]
      %v449 = vld [vmem:[%s436 + $0x60] sm:$0xff]
      %v450 = vld [vmem:[%s436 + $0x68] sm:$0xff]
      %v451 = vld [vmem:[%s436 + $0x70] sm:$0xff]
      %v452 = vld [vmem:[%s436 + $0x78] sm:$0xff]
      %v453 = vlaneseq
      %v454 = vshrl.u32 %v453, 7
      %v455 = vsub.s32 2, %v454
      %v456 = vrot.slane %v239, %v455
      %457 = vmatprep.subr.mxu0 0.0
      %458 = vmatpush1.msra.mxu0 %v437
      %459 = vmatprep.subr.mxu0 0.0
      %460 = vmatpush1.msra.mxu0 %v438
      %461 = vmatprep.subr.mxu0 0.0
      %462 = vmatpush1.msra.mxu0 %v439
      %463 = vmatprep.subr.mxu0 0.0
      %464 = vmatpush1.msra.mxu0 %v440
      %465 = vmatprep.subr.mxu0 0.0
      %466 = vmatpush1.msra.mxu0 %v441
      %467 = vmatprep.subr.mxu0 0.0
      %468 = vmatpush1.msra.mxu0 %v442
      %469 = vmatprep.subr.mxu0 0.0
      %470 = vmatpush1.msra.mxu0 %v443
      %471 = vmatprep.subr.mxu0 0.0
      %472 = vmatpush1.msra.mxu0 %v444
      %473 = vmatprep.subr.mxu0 0.0
      %474 = vmatpush1.msra.mxu0 %v445
      %475 = vmatprep.subr.mxu0 0.0
      %476 = vmatpush1.msra.mxu0 %v446
      %477 = vmatprep.subr.mxu0 0.0
      %478 = vmatpush1.msra.mxu0 %v447
      %479 = vmatprep.subr.mxu0 0.0
      %480 = vmatpush1.msra.mxu0 %v448
      %481 = vmatprep.subr.mxu0 0.0
      %482 = vmatpush1.msra.mxu0 %v449
      %483 = vmatprep.subr.mxu0 0.0
      %484 = vmatpush1.msra.mxu0 %v450
      %485 = vmatprep.subr.mxu0 0.0
      %486 = vmatpush1.msra.mxu0 %v451
      %487 = vmatprep.subr.mxu0 0.0
      %488 = vmatpush1.msra.mxu0 %v452
      %489 = vmatprep.subr.mxu0 0.0
      %490 = vmatpush1.msra.mxu0 0.0
      %491 = vmatprep.subr.mxu0 0.0
      %492 = vmatpush1.msra.mxu0 0.0
      %493 = vmatprep.subr.mxu0 0.0
      %494 = vmatpush1.msra.mxu0 0.0
      %495 = vmatprep.subr.mxu0 0.0
      %496 = vmatpush1.msra.mxu0 0.0
      %497 = vmatprep.subr.mxu0 0.0
      %498 = vmatpush1.msra.mxu0 0.0
      %499 = vmatprep.subr.mxu0 0.0
      %500 = vmatpush1.msra.mxu0 0.0
      %501 = vmatprep.subr.mxu0 0.0
      %502 = vmatpush1.msra.mxu0 0.0
      %503 = vmatprep.subr.mxu0 0.0
      %504 = vmatpush1.msra.mxu0 0.0
      %505 = vmatprep.subr.mxu0 0.0
      %506 = vmatpush1.msra.mxu0 0.0
      %507 = vmatprep.subr.mxu0 0.0
      %508 = vmatpush1.msra.mxu0 0.0
      %509 = vmatprep.subr.mxu0 0.0
      %510 = vmatpush1.msra.mxu0 0.0
      %511 = vmatprep.subr.mxu0 0.0
      %512 = vmatpush1.msra.mxu0 0.0
      %513 = vmatprep.subr.mxu0 0.0
      %514 = vmatpush1.msra.mxu0 0.0
      %515 = vmatprep.subr.mxu0 0.0
      %516 = vmatpush1.msra.mxu0 0.0
      %517 = vmatprep.subr.mxu0 0.0
      %518 = vmatpush1.msra.mxu0 0.0
      %519 = vmatprep.subr.mxu0 0.0
      %520 = vmatpush1.msra.mxu0 0.0
      %521 = vmatprep.mubr.f32.mxu0 0.0
      %522 = vmatmul.mubr.f32.gmra.mrb[0].mxu0 %v434
      %v523 = vpop.f32.mrb[0].mxu0
      %v524 = vadd.f32 %v456, %v523
      %v525 = vpop.f32.mrb[0].mxu0
      %526 = vmatprep.mubr.f32.mxu0 0.0
      %527 = vmatmul.mubr.f32.gmra.mrb[0].mxu0 %v435
      %v528 = vpop.f32.mrb[0].mxu0
      %v529 = vadd.f32 %v456, %v528
      %v530 = vpop.f32.mrb[0].mxu0
      %531 = vdwg.mxu0
      %v532 = vmax.f32 %v524, 0.0
      %v533 = vmax.f32 %v529, 0.0
      %s534 = scalar_lea.vmem %s2, 256
      %v535 = vld [vmem:[%s534] sm:$0xff]
      %v536 = vld [vmem:[%s534 + $0x8] sm:$0xff]
      %v537 = vld [vmem:[%s534 + $0x10] sm:$0xff]
      %v538 = vld [vmem:[%s534 + $0x18] sm:$0xff]
      %v539 = vld [vmem:[%s534 + $0x20] sm:$0xff]
      %v540 = vld [vmem:[%s534 + $0x28] sm:$0xff]
      %v541 = vld [vmem:[%s534 + $0x30] sm:$0xff]
      %v542 = vld [vmem:[%s534 + $0x38] sm:$0xff]
      %v543 = vld [vmem:[%s534 + $0x40] sm:$0xff]
      %v544 = vld [vmem:[%s534 + $0x48] sm:$0xff]
      %v545 = vld [vmem:[%s534 + $0x50] sm:$0xff]
      %v546 = vld [vmem:[%s534 + $0x58] sm:$0xff]
      %v547 = vld [vmem:[%s534 + $0x60] sm:$0xff]
      %v548 = vld [vmem:[%s534 + $0x68] sm:$0xff]
      %v549 = vld [vmem:[%s534 + $0x70] sm:$0xff]
      %v550 = vld [vmem:[%s534 + $0x78] sm:$0xff]
      %v551 = vlaneseq
      %v552 = vshrl.u32 %v551, 7
      %v553 = vsub.s32 3, %v552
      %v554 = vrot.slane %v239, %v553
      %555 = vmatprep.subr.mxu0 0.0
      %556 = vmatpush1.msra.mxu0 %v535
      %557 = vmatprep.subr.mxu0 0.0
      %558 = vmatpush1.msra.mxu0 %v536
      %559 = vmatprep.subr.mxu0 0.0
      %560 = vmatpush1.msra.mxu0 %v537
      %561 = vmatprep.subr.mxu0 0.0
      %562 = vmatpush1.msra.mxu0 %v538
      %563 = vmatprep.subr.mxu0 0.0
      %564 = vmatpush1.msra.mxu0 %v539
      %565 = vmatprep.subr.mxu0 0.0
      %566 = vmatpush1.msra.mxu0 %v540
      %567 = vmatprep.subr.mxu0 0.0
      %568 = vmatpush1.msra.mxu0 %v541
      %569 = vmatprep.subr.mxu0 0.0
      %570 = vmatpush1.msra.mxu0 %v542
      %571 = vmatprep.subr.mxu0 0.0
      %572 = vmatpush1.msra.mxu0 %v543
      %573 = vmatprep.subr.mxu0 0.0
      %574 = vmatpush1.msra.mxu0 %v544
      %575 = vmatprep.subr.mxu0 0.0
      %576 = vmatpush1.msra.mxu0 %v545
      %577 = vmatprep.subr.mxu0 0.0
      %578 = vmatpush1.msra.mxu0 %v546
      %579 = vmatprep.subr.mxu0 0.0
      %580 = vmatpush1.msra.mxu0 %v547
      %581 = vmatprep.subr.mxu0 0.0
      %582 = vmatpush1.msra.mxu0 %v548
      %583 = vmatprep.subr.mxu0 0.0
      %584 = vmatpush1.msra.mxu0 %v549
      %585 = vmatprep.subr.mxu0 0.0
      %586 = vmatpush1.msra.mxu0 %v550
      %587 = vmatprep.subr.mxu0 0.0
      %588 = vmatpush1.msra.mxu0 0.0
      %589 = vmatprep.subr.mxu0 0.0
      %590 = vmatpush1.msra.mxu0 0.0
      %591 = vmatprep.subr.mxu0 0.0
      %592 = vmatpush1.msra.mxu0 0.0
      %593 = vmatprep.subr.mxu0 0.0
      %594 = vmatpush1.msra.mxu0 0.0
      %595 = vmatprep.subr.mxu0 0.0
      %596 = vmatpush1.msra.mxu0 0.0
      %597 = vmatprep.subr.mxu0 0.0
      %598 = vmatpush1.msra.mxu0 0.0
      %599 = vmatprep.subr.mxu0 0.0
      %600 = vmatpush1.msra.mxu0 0.0
      %601 = vmatprep.subr.mxu0 0.0
      %602 = vmatpush1.msra.mxu0 0.0
      %603 = vmatprep.subr.mxu0 0.0
      %604 = vmatpush1.msra.mxu0 0.0
      %605 = vmatprep.subr.mxu0 0.0
      %606 = vmatpush1.msra.mxu0 0.0
      %607 = vmatprep.subr.mxu0 0.0
      %608 = vmatpush1.msra.mxu0 0.0
      %609 = vmatprep.subr.mxu0 0.0
      %610 = vmatpush1.msra.mxu0 0.0
      %611 = vmatprep.subr.mxu0 0.0
      %612 = vmatpush1.msra.mxu0 0.0
      %613 = vmatprep.subr.mxu0 0.0
      %614 = vmatpush1.msra.mxu0 0.0
      %615 = vmatprep.subr.mxu0 0.0
      %616 = vmatpush1.msra.mxu0 0.0
      %617 = vmatprep.subr.mxu0 0.0
      %618 = vmatpush1.msra.mxu0 0.0
      %619 = vmatprep.mubr.f32.mxu0 0.0
      %620 = vmatmul.mubr.f32.gmra.mrb[0].mxu0 %v532
      %v621 = vpop.f32.mrb[0].mxu0
      %v622 = vadd.f32 %v554, %v621
      %v623 = vpop.f32.mrb[0].mxu0
      %624 = vmatprep.mubr.f32.mxu0 0.0
      %625 = vmatmul.mubr.f32.gmra.mrb[0].mxu0 %v533
      %v626 = vpop.f32.mrb[0].mxu0
      %v627 = vadd.f32 %v554, %v626
      %v628 = vpop.f32.mrb[0].mxu0
      %629 = vdwg.mxu0
      %v630 = vmax.f32 %v622, 0.0
      %v631 = vmax.f32 %v627, 0.0
      %s632 = smul.u32 %s17, 16
      %s633 = scalar_lea.vmem [#allocation2], %s632
      %634 = vst [vmem:[%s633] sm:$0xff] %v630
      %635 = vst [vmem:[%s633 + $0x8] sm:$0xff] %v631
      %p636 = scmp.eq.s32.totalorder %s17, 3
      // Predicated region
      $region45: #{dnn_forward.1} parent=43 // pred_check
        %p637 = pneg %p636
      $region46: #{dnn_forward.1} parent=43 // pred_check_branch
        %639 = sbr.rel (%p637) target = $region48
      $region47: #{dnn_forward.1} parent=43 // pred_region
        %v640 = vld [vmem:[#allocation2] sm:$0xff]
        %v641 = vld [vmem:[#allocation2 + $0x8] sm:$0xff]
        %v642 = vld [vmem:[#allocation2 + $0x10] sm:$0xff]
        %v643 = vld [vmem:[#allocation2 + $0x18] sm:$0xff]
        %v644 = vld [vmem:[#allocation2 + $0x20] sm:$0xff]
        %v645 = vld [vmem:[#allocation2 + $0x28] sm:$0xff]
        %v646 = vld [vmem:[#allocation2 + $0x30] sm:$0xff]
        %v647 = vld [vmem:[#allocation2 + $0x38] sm:$0xff]
        %v648 = vld [vmem:[%s5] sm:$0x3f]
        %v649 = vadd.f32 %v640, %v641
        %v650 = vadd.f32 %v649, %v642
        %v651 = vadd.f32 %v650, %v643
        %v652 = vadd.f32 %v651, %v644
        %v653 = vadd.f32 %v652, %v645
        %v654 = vadd.f32 %v653, %v646
        %v655 = vadd.f32 %v654, %v647
        %v656 = vrot.slane %v655, 4
        %v657 = vadd.f32 %v655, %v656
        %v658 = vrot.slane %v657, 2
        %v659 = vadd.f32 %v657, %v658
        %v660 = vrot.slane %v659, 1
        %v661 = vadd.f32 %v659, %v660
        %v662 = vmul.f32 %v640, %v640
        %v663 = vmul.f32 %v641, %v641
        %v664 = vmul.f32 %v642, %v642
        %v665 = vmul.f32 %v643, %v643
        %v666 = vmul.f32 %v644, %v644
        %v667 = vmul.f32 %v645, %v645
        %v668 = vmul.f32 %v646, %v646
        %v669 = vmul.f32 %v647, %v647
        %v670 = vadd.f32 %v662, %v663
        %v671 = vadd.f32 %v670, %v664
        %v672 = vadd.f32 %v671, %v665
        %v673 = vadd.f32 %v672, %v666
        %v674 = vadd.f32 %v673, %v667
        %v675 = vadd.f32 %v674, %v668
        %v676 = vadd.f32 %v675, %v669
        %v677 = vrot.slane %v676, 4
        %v678 = vadd.f32 %v676, %v677
        %v679 = vrot.slane %v678, 2
        %v680 = vadd.f32 %v678, %v679
        %v681 = vrot.slane %v680, 1
        %v682 = vadd.f32 %v680, %v681
        %v683 = vmul.f32 %v661, 0.015625
        %v684 = vmul.f32 %v682, 0.015625
        %v685 = vmul.f32 %v683, %v683
        %v686 = vsub.f32 %v684, %v685
        %v687 = vmax.f32 %v686, 0.0
        %v688 = vsub.f32 %v640, %v683
        %v689 = vsub.f32 %v641, %v683
        %v690 = vsub.f32 %v642, %v683
        %v691 = vsub.f32 %v643, %v683
        %v692 = vsub.f32 %v644, %v683
        %v693 = vsub.f32 %v645, %v683
        %v694 = vsub.f32 %v646, %v683
        %v695 = vsub.f32 %v647, %v683
        %v696 = vadd.f32 %v687, 1e-05
        %v697 = vrsqrt.pop %v696
        %v698 = vmul.f32 %v688, %v697
        %v699 = vmul.f32 %v689, %v697
        %v700 = vmul.f32 %v690, %v697
        %v701 = vmul.f32 %v691, %v697
        %v702 = vmul.f32 %v692, %v697
        %v703 = vmul.f32 %v693, %v697
        %v704 = vmul.f32 %v694, %v697
        %v705 = vmul.f32 %v695, %v697
        %v706 = vlaneseq
        %v707 = vshrl.u32 %v706, 7
        %v708 = vsub.s32 0, %v707
        %v709 = vrot.slane %v648, %v708
        %v710 = vmul.f32 %v709, %v698
        %v711 = vmul.f32 %v709, %v699
        %v712 = vmul.f32 %v709, %v700
        %v713 = vmul.f32 %v709, %v701
        %v714 = vmul.f32 %v709, %v702
        %v715 = vmul.f32 %v709, %v703
        %v716 = vmul.f32 %v709, %v704
        %v717 = vmul.f32 %v709, %v705
        %v718 = vlaneseq
        %v719 = vshrl.u32 %v718, 7
        %v720 = vsub.s32 1, %v719
        %v721 = vrot.slane %v648, %v720
        %v722 = vadd.f32 %v710, %v721
        %v723 = vadd.f32 %v711, %v721
        %v724 = vadd.f32 %v712, %v721
        %v725 = vadd.f32 %v713, %v721
        %v726 = vadd.f32 %v714, %v721
        %v727 = vadd.f32 %v715, %v721
        %v728 = vadd.f32 %v716, %v721
        %v729 = vadd.f32 %v717, %v721
        %v730 = vld [vmem:[%s4] sm:$0xff]
        %v731 = vld [vmem:[%s4 + $0x8] sm:$0xff]
        %v732 = vld [vmem:[%s4 + $0x10] sm:$0xff]
        %v733 = vld [vmem:[%s4 + $0x18] sm:$0xff]
        %v734 = vld [vmem:[%s4 + $0x20] sm:$0xff]
        %v735 = vld [vmem:[%s4 + $0x28] sm:$0xff]
        %v736 = vld [vmem:[%s4 + $0x30] sm:$0xff]
        %v737 = vld [vmem:[%s4 + $0x38] sm:$0xff]
        %v738 = vld [vmem:[%s4 + $0x40] sm:$0xff]
        %v739 = vld [vmem:[%s4 + $0x48] sm:$0xff]
        %v740 = vld [vmem:[%s4 + $0x50] sm:$0xff]
        %v741 = vld [vmem:[%s4 + $0x58] sm:$0xff]
        %v742 = vld [vmem:[%s4 + $0x60] sm:$0xff]
        %v743 = vld [vmem:[%s4 + $0x68] sm:$0xff]
        %v744 = vld [vmem:[%s4 + $0x70] sm:$0xff]
        %v745 = vld [vmem:[%s4 + $0x78] sm:$0xff]
        %v746 = vlaneseq
        %v747 = vshrl.u32 %v746, 7
        %v748 = vsub.s32 4, %v747
        %v749 = vrot.slane %v648, %v748
        %750 = vmatprep.subr.mxu0 0.0
        %751 = vmatpush1.msra.mxu0 %v730
        %752 = vmatprep.subr.mxu0 0.0
        %753 = vmatpush1.msra.mxu0 %v731
        %754 = vmatprep.subr.mxu0 0.0
        %755 = vmatpush1.msra.mxu0 %v732
        %756 = vmatprep.subr.mxu0 0.0
        %757 = vmatpush1.msra.mxu0 %v733
        %758 = vmatprep.subr.mxu0 0.0
        %759 = vmatpush1.msra.mxu0 %v734
        %760 = vmatprep.subr.mxu0 0.0
        %761 = vmatpush1.msra.mxu0 %v735
        %762 = vmatprep.subr.mxu0 0.0
        %763 = vmatpush1.msra.mxu0 %v736
        %764 = vmatprep.subr.mxu0 0.0
        %765 = vmatpush1.msra.mxu0 %v737
        %766 = vmatprep.subr.mxu0 0.0
        %767 = vmatpush1.msra.mxu0 %v738
        %768 = vmatprep.subr.mxu0 0.0
        %769 = vmatpush1.msra.mxu0 %v739
        %770 = vmatprep.subr.mxu0 0.0
        %771 = vmatpush1.msra.mxu0 %v740
        %772 = vmatprep.subr.mxu0 0.0
        %773 = vmatpush1.msra.mxu0 %v741
        %774 = vmatprep.subr.mxu0 0.0
        %775 = vmatpush1.msra.mxu0 %v742
        %776 = vmatprep.subr.mxu0 0.0
        %777 = vmatpush1.msra.mxu0 %v743
        %778 = vmatprep.subr.mxu0 0.0
        %779 = vmatpush1.msra.mxu0 %v744
        %780 = vmatprep.subr.mxu0 0.0
        %781 = vmatpush1.msra.mxu0 %v745
        %782 = vmatprep.subr.mxu0 0.0
        %783 = vmatpush1.msra.mxu0 0.0
        %784 = vmatprep.subr.mxu0 0.0
        %785 = vmatpush1.msra.mxu0 0.0
        %786 = vmatprep.subr.mxu0 0.0
        %787 = vmatpush1.msra.mxu0 0.0
        %788 = vmatprep.subr.mxu0 0.0
        %789 = vmatpush1.msra.mxu0 0.0
        %790 = vmatprep.subr.mxu0 0.0
        %791 = vmatpush1.msra.mxu0 0.0
        %792 = vmatprep.subr.mxu0 0.0
        %793 = vmatpush1.msra.mxu0 0.0
        %794 = vmatprep.subr.mxu0 0.0
        %795 = vmatpush1.msra.mxu0 0.0
        %796 = vmatprep.subr.mxu0 0.0
        %797 = vmatpush1.msra.mxu0 0.0
        %798 = vmatprep.subr.mxu0 0.0
        %799 = vmatpush1.msra.mxu0 0.0
        %800 = vmatprep.subr.mxu0 0.0
        %801 = vmatpush1.msra.mxu0 0.0
        %802 = vmatprep.subr.mxu0 0.0
        %803 = vmatpush1.msra.mxu0 0.0
        %804 = vmatprep.subr.mxu0 0.0
        %805 = vmatpush1.msra.mxu0 0.0
        %806 = vmatprep.subr.mxu0 0.0
        %807 = vmatpush1.msra.mxu0 0.0
        %808 = vmatprep.subr.mxu0 0.0
        %809 = vmatpush1.msra.mxu0 0.0
        %810 = vmatprep.subr.mxu0 0.0
        %811 = vmatpush1.msra.mxu0 0.0
        %812 = vmatprep.subr.mxu0 0.0
        %813 = vmatpush1.msra.mxu0 0.0
        %814 = vmatprep.mubr.f32.mxu0 0.0
        %815 = vmatmul.mubr.f32.gmra.mrb[0].mxu0 %v722
        %v816 = vpop.f32.mrb[0].mxu0
        %v817 = vadd.f32 %v749, %v816
        %v818 = vpop.f32.mrb[0].mxu0
        %819 = vmatprep.mubr.f32.mxu0 0.0
        %820 = vmatmul.mubr.f32.gmra.mrb[0].mxu0 %v723
        %v821 = vpop.f32.mrb[0].mxu0
        %v822 = vadd.f32 %v749, %v821
        %v823 = vpop.f32.mrb[0].mxu0
        %824 = vmatprep.mubr.f32.mxu0 0.0
        %825 = vmatmul.mubr.f32.gmra.mrb[0].mxu0 %v724
        %v826 = vpop.f32.mrb[0].mxu0
        %v827 = vadd.f32 %v749, %v826
        %v828 = vpop.f32.mrb[0].mxu0
        %829 = vmatprep.mubr.f32.mxu0 0.0
        %830 = vmatmul.mubr.f32.gmra.mrb[0].mxu0 %v725
        %v831 = vpop.f32.mrb[0].mxu0
        %v832 = vadd.f32 %v749, %v831
        %v833 = vpop.f32.mrb[0].mxu0
        %834 = vmatprep.mubr.f32.mxu0 0.0
        %835 = vmatmul.mubr.f32.gmra.mrb[0].mxu0 %v726
        %v836 = vpop.f32.mrb[0].mxu0
        %v837 = vadd.f32 %v749, %v836
        %v838 = vpop.f32.mrb[0].mxu0
        %839 = vmatprep.mubr.f32.mxu0 0.0
        %840 = vmatmul.mubr.f32.gmra.mrb[0].mxu0 %v727
        %v841 = vpop.f32.mrb[0].mxu0
        %v842 = vadd.f32 %v749, %v841
        %v843 = vpop.f32.mrb[0].mxu0
        %844 = vmatprep.mubr.f32.mxu0 0.0
        %845 = vmatmul.mubr.f32.gmra.mrb[0].mxu0 %v728
        %v846 = vpop.f32.mrb[0].mxu0
        %v847 = vadd.f32 %v749, %v846
        %v848 = vpop.f32.mrb[0].mxu0
        %849 = vmatprep.mubr.f32.mxu0 0.0
        %850 = vmatmul.mubr.f32.gmra.mrb[0].mxu0 %v729
        %v851 = vpop.f32.mrb[0].mxu0
        %v852 = vadd.f32 %v749, %v851
        %v853 = vpop.f32.mrb[0].mxu0
        %854 = vdwg.mxu0
        %v855 = vmax.f32 %v817, 0.0
        %v856 = vmax.f32 %v822, 0.0
        %v857 = vmax.f32 %v827, 0.0
        %v858 = vmax.f32 %v832, 0.0
        %v859 = vmax.f32 %v837, 0.0
        %v860 = vmax.f32 %v842, 0.0
        %v861 = vmax.f32 %v847, 0.0
        %v862 = vmax.f32 %v852, 0.0
        %v863 = vadd.f32 %v855, %v856
        %v864 = vadd.f32 %v863, %v857
        %v865 = vadd.f32 %v864, %v858
        %v866 = vadd.f32 %v865, %v859
        %v867 = vadd.f32 %v866, %v860
        %v868 = vadd.f32 %v867, %v861
        %v869 = vadd.f32 %v868, %v862
        %v870 = vrot.slane %v869, 4
        %v871 = vadd.f32 %v869, %v870
        %v872 = vrot.slane %v871, 2
        %v873 = vadd.f32 %v871, %v872
        %v874 = vrot.slane %v873, 1
        %v875 = vadd.f32 %v873, %v874
        %v876 = vmul.f32 %v855, %v855
        %v877 = vmul.f32 %v856, %v856
        %v878 = vmul.f32 %v857, %v857
        %v879 = vmul.f32 %v858, %v858
        %v880 = vmul.f32 %v859, %v859
        %v881 = vmul.f32 %v860, %v860
        %v882 = vmul.f32 %v861, %v861
        %v883 = vmul.f32 %v862, %v862
        %v884 = vadd.f32 %v876, %v877
        %v885 = vadd.f32 %v884, %v878
        %v886 = vadd.f32 %v885, %v879
        %v887 = vadd.f32 %v886, %v880
        %v888 = vadd.f32 %v887, %v881
        %v889 = vadd.f32 %v888, %v882
        %v890 = vadd.f32 %v889, %v883
        %v891 = vrot.slane %v890, 4
        %v892 = vadd.f32 %v890, %v891
        %v893 = vrot.slane %v892, 2
        %v894 = vadd.f32 %v892, %v893
        %v895 = vrot.slane %v894, 1
        %v896 = vadd.f32 %v894, %v895
        %v897 = vmul.f32 %v875, 0.015625
        %v898 = vmul.f32 %v896, 0.015625
        %v899 = vmul.f32 %v897, %v897
        %v900 = vsub.f32 %v898, %v899
        %v901 = vmax.f32 %v900, 0.0
        %v902 = vsub.f32 %v855, %v897
        %v903 = vsub.f32 %v856, %v897
        %v904 = vsub.f32 %v857, %v897
        %v905 = vsub.f32 %v858, %v897
        %v906 = vsub.f32 %v859, %v897
        %v907 = vsub.f32 %v860, %v897
        %v908 = vsub.f32 %v861, %v897
        %v909 = vsub.f32 %v862, %v897
        %v910 = vadd.f32 %v901, 1e-05
        %v911 = vrsqrt.pop %v910
        %v912 = vmul.f32 %v902, %v911
        %v913 = vmul.f32 %v903, %v911
        %v914 = vmul.f32 %v904, %v911
        %v915 = vmul.f32 %v905, %v911
        %v916 = vmul.f32 %v906, %v911
        %v917 = vmul.f32 %v907, %v911
        %v918 = vmul.f32 %v908, %v911
        %v919 = vmul.f32 %v909, %v911
        %v920 = vlaneseq
        %v921 = vshrl.u32 %v920, 7
        %v922 = vsub.s32 2, %v921
        %v923 = vrot.slane %v648, %v922
        %v924 = vmul.f32 %v923, %v912
        %v925 = vmul.f32 %v923, %v913
        %v926 = vmul.f32 %v923, %v914
        %v927 = vmul.f32 %v923, %v915
        %v928 = vmul.f32 %v923, %v916
        %v929 = vmul.f32 %v923, %v917
        %v930 = vmul.f32 %v923, %v918
        %v931 = vmul.f32 %v923, %v919
        %v932 = vlaneseq
        %v933 = vshrl.u32 %v932, 7
        %v934 = vsub.s32 3, %v933
        %v935 = vrot.slane %v648, %v934
        %v936 = vadd.f32 %v924, %v935
        %v937 = vadd.f32 %v925, %v935
        %v938 = vadd.f32 %v926, %v935
        %v939 = vadd.f32 %v927, %v935
        %v940 = vadd.f32 %v928, %v935
        %v941 = vadd.f32 %v929, %v935
        %v942 = vadd.f32 %v930, %v935
        %v943 = vadd.f32 %v931, %v935
        %s944 = scalar_lea.vmem %s4, 128
        %v945 = vld [vmem:[%s944] sm:$0xff]
        %v946 = vld [vmem:[%s944 + $0x8] sm:$0xff]
        %v947 = vld [vmem:[%s944 + $0x10] sm:$0xff]
        %v948 = vld [vmem:[%s944 + $0x18] sm:$0xff]
        %v949 = vld [vmem:[%s944 + $0x20] sm:$0xff]
        %v950 = vld [vmem:[%s944 + $0x28] sm:$0xff]
        %v951 = vld [vmem:[%s944 + $0x30] sm:$0xff]
        %v952 = vld [vmem:[%s944 + $0x38] sm:$0xff]
        %v953 = vld [vmem:[%s944 + $0x40] sm:$0xff]
        %v954 = vld [vmem:[%s944 + $0x48] sm:$0xff]
        %v955 = vld [vmem:[%s944 + $0x50] sm:$0xff]
        %v956 = vld [vmem:[%s944 + $0x58] sm:$0xff]
        %v957 = vld [vmem:[%s944 + $0x60] sm:$0xff]
        %v958 = vld [vmem:[%s944 + $0x68] sm:$0xff]
        %v959 = vld [vmem:[%s944 + $0x70] sm:$0xff]
        %v960 = vld [vmem:[%s944 + $0x78] sm:$0xff]
        %v961 = vlaneseq
        %v962 = vshrl.u32 %v961, 7
        %v963 = vsub.s32 5, %v962
        %v964 = vrot.slane %v648, %v963
        %965 = vmatprep.subr.mxu0 0.0
        %966 = vmatpush1.msra.mxu0 %v945
        %967 = vmatprep.subr.mxu0 0.0
        %968 = vmatpush1.msra.mxu0 %v946
        %969 = vmatprep.subr.mxu0 0.0
        %970 = vmatpush1.msra.mxu0 %v947
        %971 = vmatprep.subr.mxu0 0.0
        %972 = vmatpush1.msra.mxu0 %v948
        %973 = vmatprep.subr.mxu0 0.0
        %974 = vmatpush1.msra.mxu0 %v949
        %975 = vmatprep.subr.mxu0 0.0
        %976 = vmatpush1.msra.mxu0 %v950
        %977 = vmatprep.subr.mxu0 0.0
        %978 = vmatpush1.msra.mxu0 %v951
        %979 = vmatprep.subr.mxu0 0.0
        %980 = vmatpush1.msra.mxu0 %v952
        %981 = vmatprep.subr.mxu0 0.0
        %982 = vmatpush1.msra.mxu0 %v953
        %983 = vmatprep.subr.mxu0 0.0
        %984 = vmatpush1.msra.mxu0 %v954
        %985 = vmatprep.subr.mxu0 0.0
        %986 = vmatpush1.msra.mxu0 %v955
        %987 = vmatprep.subr.mxu0 0.0
        %988 = vmatpush1.msra.mxu0 %v956
        %989 = vmatprep.subr.mxu0 0.0
        %990 = vmatpush1.msra.mxu0 %v957
        %991 = vmatprep.subr.mxu0 0.0
        %992 = vmatpush1.msra.mxu0 %v958
        %993 = vmatprep.subr.mxu0 0.0
        %994 = vmatpush1.msra.mxu0 %v959
        %995 = vmatprep.subr.mxu0 0.0
        %996 = vmatpush1.msra.mxu0 %v960
        %997 = vmatprep.subr.mxu0 0.0
        %998 = vmatpush1.msra.mxu0 0.0
        %999 = vmatprep.subr.mxu0 0.0
        %1000 = vmatpush1.msra.mxu0 0.0
        %1001 = vmatprep.subr.mxu0 0.0
        %1002 = vmatpush1.msra.mxu0 0.0
        %1003 = vmatprep.subr.mxu0 0.0
        %1004 = vmatpush1.msra.mxu0 0.0
        %1005 = vmatprep.subr.mxu0 0.0
        %1006 = vmatpush1.msra.mxu0 0.0
        %1007 = vmatprep.subr.mxu0 0.0
        %1008 = vmatpush1.msra.mxu0 0.0
        %1009 = vmatprep.subr.mxu0 0.0
        %1010 = vmatpush1.msra.mxu0 0.0
        %1011 = vmatprep.subr.mxu0 0.0
        %1012 = vmatpush1.msra.mxu0 0.0
        %1013 = vmatprep.subr.mxu0 0.0
        %1014 = vmatpush1.msra.mxu0 0.0
        %1015 = vmatprep.subr.mxu0 0.0
        %1016 = vmatpush1.msra.mxu0 0.0
        %1017 = vmatprep.subr.mxu0 0.0
        %1018 = vmatpush1.msra.mxu0 0.0
        %1019 = vmatprep.subr.mxu0 0.0
        %1020 = vmatpush1.msra.mxu0 0.0
        %1021 = vmatprep.subr.mxu0 0.0
        %1022 = vmatpush1.msra.mxu0 0.0
        %1023 = vmatprep.subr.mxu0 0.0
        %1024 = vmatpush1.msra.mxu0 0.0
        %1025 = vmatprep.subr.mxu0 0.0
        %1026 = vmatpush1.msra.mxu0 0.0
        %1027 = vmatprep.subr.mxu0 0.0
        %1028 = vmatpush1.msra.mxu0 0.0
        %1029 = vmatprep.mubr.f32.mxu0 0.0
        %1030 = vmatmul.mubr.f32.gmra.mrb[0].mxu0 %v936
        %v1031 = vpop.f32.mrb[0].mxu0
        %v1032 = vadd.f32 %v964, %v1031
        %v1033 = vpop.f32.mrb[0].mxu0
        %1034 = vmatprep.mubr.f32.mxu0 0.0
        %1035 = vmatmul.mubr.f32.gmra.mrb[0].mxu0 %v937
        %v1036 = vpop.f32.mrb[0].mxu0
        %v1037 = vadd.f32 %v964, %v1036
        %v1038 = vpop.f32.mrb[0].mxu0
        %1039 = vmatprep.mubr.f32.mxu0 0.0
        %1040 = vmatmul.mubr.f32.gmra.mrb[0].mxu0 %v938
        %v1041 = vpop.f32.mrb[0].mxu0
        %v1042 = vadd.f32 %v964, %v1041
        %v1043 = vpop.f32.mrb[0].mxu0
        %1044 = vmatprep.mubr.f32.mxu0 0.0
        %1045 = vmatmul.mubr.f32.gmra.mrb[0].mxu0 %v939
        %v1046 = vpop.f32.mrb[0].mxu0
        %v1047 = vadd.f32 %v964, %v1046
        %v1048 = vpop.f32.mrb[0].mxu0
        %1049 = vmatprep.mubr.f32.mxu0 0.0
        %1050 = vmatmul.mubr.f32.gmra.mrb[0].mxu0 %v940
        %v1051 = vpop.f32.mrb[0].mxu0
        %v1052 = vadd.f32 %v964, %v1051
        %v1053 = vpop.f32.mrb[0].mxu0
        %1054 = vmatprep.mubr.f32.mxu0 0.0
        %1055 = vmatmul.mubr.f32.gmra.mrb[0].mxu0 %v941
        %v1056 = vpop.f32.mrb[0].mxu0
        %v1057 = vadd.f32 %v964, %v1056
        %v1058 = vpop.f32.mrb[0].mxu0
        %1059 = vmatprep.mubr.f32.mxu0 0.0
        %1060 = vmatmul.mubr.f32.gmra.mrb[0].mxu0 %v942
        %v1061 = vpop.f32.mrb[0].mxu0
        %v1062 = vadd.f32 %v964, %v1061
        %v1063 = vpop.f32.mrb[0].mxu0
        %1064 = vmatprep.mubr.f32.mxu0 0.0
        %1065 = vmatmul.mubr.f32.gmra.mrb[0].mxu0 %v943
        %v1066 = vpop.f32.mrb[0].mxu0
        %v1067 = vadd.f32 %v964, %v1066
        %v1068 = vpop.f32.mrb[0].mxu0
        %1069 = vdwg.mxu0
        %v1070 = vlaneseq
        %v1071 = vand.u32 %v1070, 127
        %vm1072 = vcmp.lt.s32.totalorder %v1071, 3
        %v1073 = vsel %vm1072, %v1032, -1e+30
        %v1074 = vsel %vm1072, %v1037, -1e+30
        %v1075 = vsel %vm1072, %v1042, -1e+30
        %v1076 = vsel %vm1072, %v1047, -1e+30
        %v1077 = vsel %vm1072, %v1052, -1e+30
        %v1078 = vsel %vm1072, %v1057, -1e+30
        %v1079 = vsel %vm1072, %v1062, -1e+30
        %v1080 = vsel %vm1072, %v1067, -1e+30
        %1081 = vmax.xlane.f32.xlu0 %v1073
        %v1082 = vpop.xlane.xlu0 %1081
        %1083 = vmax.xlane.f32.xlu0 %v1074
        %v1084 = vpop.xlane.xlu0 %1083
        %1085 = vmax.xlane.f32.xlu0 %v1075
        %v1086 = vpop.xlane.xlu0 %1085
        %1087 = vmax.xlane.f32.xlu0 %v1076
        %v1088 = vpop.xlane.xlu0 %1087
        %1089 = vmax.xlane.f32.xlu0 %v1077
        %v1090 = vpop.xlane.xlu0 %1089
        %1091 = vmax.xlane.f32.xlu0 %v1078
        %v1092 = vpop.xlane.xlu0 %1091
        %1093 = vmax.xlane.f32.xlu0 %v1079
        %v1094 = vpop.xlane.xlu0 %1093
        %1095 = vmax.xlane.f32.xlu0 %v1080
        %v1096 = vpop.xlane.xlu0 %1095
        %v1097 = vsub.f32 %v1073, %v1082
        %v1098 = vsub.f32 %v1074, %v1084
        %v1099 = vsub.f32 %v1075, %v1086
        %v1100 = vsub.f32 %v1076, %v1088
        %v1101 = vsub.f32 %v1077, %v1090
        %v1102 = vsub.f32 %v1078, %v1092
        %v1103 = vsub.f32 %v1079, %v1094
        %v1104 = vsub.f32 %v1080, %v1096
        %v1105 = vmul.f32 %v1097, 1.442695
        %v1106 = vpow.pop %v1105
        %v1107 = vmul.f32 %v1098, 1.442695
        %v1108 = vpow.pop %v1107
        %v1109 = vmul.f32 %v1099, 1.442695
        %v1110 = vpow.pop %v1109
        %v1111 = vmul.f32 %v1100, 1.442695
        %v1112 = vpow.pop %v1111
        %v1113 = vmul.f32 %v1101, 1.442695
        %v1114 = vpow.pop %v1113
        %v1115 = vmul.f32 %v1102, 1.442695
        %v1116 = vpow.pop %v1115
        %v1117 = vmul.f32 %v1103, 1.442695
        %v1118 = vpow.pop %v1117
        %v1119 = vmul.f32 %v1104, 1.442695
        %v1120 = vpow.pop %v1119
        %v1121 = vsel %vm1072, %v1106, 0.0
        %v1122 = vsel %vm1072, %v1108, 0.0
        %v1123 = vsel %vm1072, %v1110, 0.0
        %v1124 = vsel %vm1072, %v1112, 0.0
        %v1125 = vsel %vm1072, %v1114, 0.0
        %v1126 = vsel %vm1072, %v1116, 0.0
        %v1127 = vsel %vm1072, %v1118, 0.0
        %v1128 = vsel %vm1072, %v1120, 0.0
        %1129 = vadd.xlane.f32.xlu0 %v1121
        %v1130 = vpop.xlane.xlu0 %1129
        %1131 = vadd.xlane.f32.xlu0 %v1122
        %v1132 = vpop.xlane.xlu0 %1131
        %1133 = vadd.xlane.f32.xlu0 %v1123
        %v1134 = vpop.xlane.xlu0 %1133
        %1135 = vadd.xlane.f32.xlu0 %v1124
        %v1136 = vpop.xlane.xlu0 %1135
        %1137 = vadd.xlane.f32.xlu0 %v1125
        %v1138 = vpop.xlane.xlu0 %1137
        %1139 = vadd.xlane.f32.xlu0 %v1126
        %v1140 = vpop.xlane.xlu0 %1139
        %1141 = vadd.xlane.f32.xlu0 %v1127
        %v1142 = vpop.xlane.xlu0 %1141
        %1143 = vadd.xlane.f32.xlu0 %v1128
        %v1144 = vpop.xlane.xlu0 %1143
        %v1145 = vrcp.pop %v1130
        %v1146 = vrcp.pop %v1132
        %v1147 = vrcp.pop %v1134
        %v1148 = vrcp.pop %v1136
        %v1149 = vrcp.pop %v1138
        %v1150 = vrcp.pop %v1140
        %v1151 = vrcp.pop %v1142
        %v1152 = vrcp.pop %v1144
        %v1153 = vmul.f32 %v1121, %v1145
        %v1154 = vmul.f32 %v1122, %v1146
        %v1155 = vmul.f32 %v1123, %v1147
        %v1156 = vmul.f32 %v1124, %v1148
        %v1157 = vmul.f32 %v1125, %v1149
        %v1158 = vmul.f32 %v1126, %v1150
        %v1159 = vmul.f32 %v1127, %v1151
        %v1160 = vmul.f32 %v1128, %v1152
        %1161 = vst [vmem:[%s6] sm:$0xff] %v1153
        %1162 = vst [vmem:[%s6 + $0x8] sm:$0xff] %v1154
        %1163 = vst [vmem:[%s6 + $0x10] sm:$0xff] %v1155
        %1164 = vst [vmem:[%s6 + $0x18] sm:$0xff] %v1156
        %1165 = vst [vmem:[%s6 + $0x20] sm:$0xff] %v1157
        %1166 = vst [vmem:[%s6 + $0x28] sm:$0xff] %v1158
        %1167 = vst [vmem:[%s6 + $0x30] sm:$0xff] %v1159
        %1168 = vst [vmem:[%s6 + $0x38] sm:$0xff] %v1160
      $region48: #{dnn_forward.1} parent=43 // pred_fallthru
        _
      // Predicated region
      $region49: #{dnn_forward.1} parent=43 // pred_check
        %p1169 = pneg %p161
      $region50: #{dnn_forward.1} parent=43 // pred_check_branch
        %1171 = sbr.rel (%p1169) target = $region52
      $region51: #{dnn_forward.1} parent=43 // pred_region
        _
      $region52: #{dnn_forward.1} parent=43 // pred_fallthru
        _
      // Predicated region
      $region53: #{dnn_forward.1} parent=43 // pred_check
        %p1172 = pneg %p161
      $region54: #{dnn_forward.1} parent=43 // pred_check_branch
        %1174 = sbr.rel (%p1172) target = $region56
      $region55: #{dnn_forward.1} parent=43 // pred_region
        _
      $region56: #{dnn_forward.1} parent=43 // pred_fallthru
        _
    $region44: #{dnn_forward.1} parent=5 // pred_fallthru
      _
    %p1175 = scmp.le.s32.totalorder 2, %s12
    // Predicated region
    $region57: #{dnn_forward.1} parent=5 // pred_check
      %p1176 = pneg %p1175
    $region58: #{dnn_forward.1} parent=5 // pred_check_branch
      %1178 = sbr.rel (%p1176) target = $region60
    $region59: #{dnn_forward.1} parent=5 // pred_region
      %s1179 = ssub.s32 %s12, 2
    $region60: #{dnn_forward.1} parent=5 // pred_fallthru
      _
  $region6: #{dnn_forward.1} parent=0 // loop_footer
    %s16 = sadd.s32 1, %s12
  $region7: #{dnn_forward.1} parent=0 // loop_footer_branch
    %11 = sbr.rel target = $region3
  $region8: #{dnn_forward.1} parent=0 // loop_exit
    _

</llo_original>
